<compile_context>
chip_gen: v5e
topology: v5e:2x2
jax: 0.10.0
libtpu: 0.0.40
codegen_flags: <defaults>
</compile_context>

<pallas_src>
import jax
import jax.numpy as jnp
from jax import lax
from jax.experimental import pallas as pl
from jax.experimental.pallas import tpu as pltpu


def _relu(x):
    return jnp.maximum(x, 0.0)


# -----------------------------------------------------------------------------
# Kernel (all operands are (features, columns); columns = bs*2N rows of the
# original PyTorch formulation)
# -----------------------------------------------------------------------------
def qmix_kernel(h01_ref, ht_ref, e_ref,
                wsb_ref,                        # fc_s  w|b folded      (32, 4N+1)
                wohb_ref,                       # fused fc_o+fc0[0] w|b (144, 5)
                wc1s_ref, wc1o_ref, bc1_ref,    # fc_c[0] split         (128,32), (128,16), (128,1)
                wc2_ref, bc2_ref,               # fc_c[1]               (64,128), (64, 1)
                wc3_ref, bc3_ref,               # fc_c[2]               (1, 64),  (1, 1)
                w0b_ref, b0b_ref,               # fc0[1]                (256,128), (256, 1)
                w1_ref, b1_ref,                 # fc1                   (64,256), (64, 1)
                w2_ref, b2_ref,                 # fc2                   (2N, 64), (2N, 1)
                wv_ref, bv_ref,                 # value                 (1, 2N),  (1, 1)
                out_ref):
    f32 = jnp.float32
    h01 = h01_ref[...]     # (TB, 4N+1) one row per batch element, last col = 1 (bias)
    ht = ht_ref[...]       # (5, TM)    per-column (obs - feat) | 1, TM = TB * 2N
    e = e_ref[...]         # (TB, TM)   exact 0/1 column-expansion matrix

    # ---- fc_s on the TB batch rows only (bias folded into the matmul) ----
    # (32, 4N+1) x (TB, 4N+1)^T -> (32, TB)
    s_small = _relu(
        lax.dot_general(wsb_ref[...], h01, (((1,), (1,)), ((), ())),
                        preferred_element_type=f32))
    # expand each batch column to its 2N duplicate columns (0/1 matmul)
    s = jnp.dot(s_small, e, preferred_element_type=f32)                               # (32, TM)

    # ---- fused fc_o + fc0[0] (shared K=4 input, bias folded via ones row) ----
    oh = _relu(jnp.dot(wohb_ref[...], ht, preferred_element_type=f32))                # (144, TM)
    o = oh[:16, :]                                                                     # (16, TM)
    x = oh[16:, :]                                                                     # (128, TM)

    # ---- fc_c with the lane concat removed (two accumulating matmuls) ----
    c = _relu(jnp.dot(wc1s_ref[...], s, preferred_element_type=f32)
              + jnp.dot(wc1o_ref[...], o, preferred_element_type=f32)
              + bc1_ref[...])                                                          # (128, TM)
    c = _relu(jnp.dot(wc2_ref[...], c, preferred_element_type=f32) + bc2_ref[...])     # (64, TM)
    weights = jnp.dot(wc3_ref[...], c, preferred_element_type=f32) + bc3_ref[...]      # (1, TM)

    # ---- q-value branch: fc0[1] -> fc1 -> fc2 -> value ----
    x = _relu(jnp.dot(w0b_ref[...], x, preferred_element_type=f32) + b0b_ref[...])     # (256, TM)
    x = _relu(jnp.dot(w1_ref[...], x, preferred_element_type=f32) + b1_ref[...])       # (64, TM)
    x = _relu(jnp.dot(w2_ref[...], x, preferred_element_type=f32) + b2_ref[...])       # (2N, TM)
    q = jnp.dot(wv_ref[...], x, preferred_element_type=f32) + bv_ref[...]              # (1, TM)

    out_ref[...] = q * weights      # (1, TM): lane-dense store


# -----------------------------------------------------------------------------
# Parameters (PyTorch Linear layout: weight (in, out), bias (1, out))
# -----------------------------------------------------------------------------
def init_params(key, N):
    layer_dims = [
        (4 * N, 32),      # fc_s
        (4, 16),          # fc_o
        (16 + 32, 128),   # fc_c[0]
        (128, 64),        # fc_c[1]
        (64, 1),          # fc_c[2]
        (4, 128),         # fc0[0]
        (128, 256),       # fc0[1]
        (256, 64),        # fc1
        (64, 2 * N),      # fc2  (obs_space[0]*2 with obs_space=(N,4))
        (2 * N, 1),       # value
    ]
    params = []
    for din, dout in layer_dims:
        key, kw, kb = jax.random.split(key, 3)
        scale = 1.0 / jnp.sqrt(jnp.float32(din))
        w = jax.random.uniform(kw, (din, dout), jnp.float32, -scale, scale)
        b = jax.random.uniform(kb, (1, dout), jnp.float32, -scale, scale)
        params += [w, b]
    # TODO(synk): self.adv = nn.Linear(2N, num_actions) is defined in __init__
    # but never used in forward(), so it is intentionally omitted.
    return params


def prepare_params(params):
    """Convert PyTorch-layout params into the kernel's (dout, din) layout:
    fold fc_s / (fused fc_o + fc0[0]) biases into their weight matrices and
    split fc_c[0] into its s- and o- halves."""
    (ws_w, ws_b, wo_w, wo_b, wc1_w, wc1_b, wc2_w, wc2_b, wc3_w, wc3_b,
     w0a_w, w0a_b, w0b_w, w0b_b, w1_w, w1_b, w2_w, w2_b, wv_w, wv_b) = params
    wsb = jnp.concatenate([ws_w.T, ws_b.T], axis=1)                       # (32, 4N+1)
    wohb = jnp.concatenate(
        [jnp.concatenate([wo_w.T, w0a_w.T], axis=0),                      # (144, 4)
         jnp.concatenate([wo_b.T, w0a_b.T], axis=0)], axis=1)             # (144, 5)
    return [
        wsb,                                   # fc_s (bias folded)
        wohb,                                  # fused fc_o + fc0[0] (bias folded)
        wc1_w[:32].T, wc1_w[32:].T, wc1_b.T,   # fc_c[0] split (s-half, o-half)
        wc2_w.T, wc2_b.T,                      # fc_c[1]
        wc3_w.T, wc3_b.T,                      # fc_c[2]
        w0b_w.T, w0b_b.T,                      # fc0[1]
        w1_w.T, w1_b.T,                        # fc1
        w2_w.T, w2_b.T,                        # fc2
        wv_w.T, wv_b.T,                        # value
    ]


# -----------------------------------------------------------------------------
# Wrapper
# -----------------------------------------------------------------------------
def _choose_tile(bs, two_n, target_cols=1024):
    """Pick TB = batch rows per grid step.

    Constraints: bs % TB == 0; the h01 block (TB, 4N+1) needs TB % 8 == 0 or
    TB == bs; the lane-tiled blocks (.., TB*2N) need TB*2N % 128 == 0 or a
    single full-array block. target_cols ~1K keeps the per-step activations a
    few MB: safe for v7x's 64 MiB VMEM, with headroom to spare on v5e/v6e.
    """
    max_tb = max(1, min(bs, target_cols // two_n))
    for tb in range(max_tb, 0, -1):
        if bs % tb:
            continue
        cols = tb * two_n
        if (tb % 8 == 0 or tb == bs) and (cols % 128 == 0 or tb == bs):
            return tb
    return bs


def qmix_forward(obs, feat, params, N, *, target_cols=1024):
    bs = obs.shape[0]
    two_n = 2 * N
    m = bs * two_n

    # --- cheap XLA prologue: replicate the torch repeat/reshape glue ---
    h01 = obs.reshape(bs, -1).astype(jnp.float32)                      # (bs, 4N)
    h11 = feat.reshape(bs, -1).astype(jnp.float32)                     # (bs, 8)
    h01b = jnp.concatenate([h01, jnp.ones((bs, 1), jnp.float32)], 1)   # (bs, 4N+1) bias col
    h01e = jnp.tile(h01.reshape(-1, 4), (1, 2)).reshape(-1, 4)         # (M, 4)
    h11e = jnp.tile(h11, (1, N)).reshape(-1, 4)                        # (M, 4)
    ht = jnp.concatenate([(h01e - h11e).T,
                          jnp.ones((1, m), jnp.float32)], 0)           # (5, M) lane-dense + bias row

    kparams = prepare_params(params)

    tb = _choose_tile(bs, two_n, target_cols)
    tm = tb * two_n
    num_blocks = bs // tb

    # exact 0/1 expansion: tile-local column j belongs to tile-local batch j // 2N
    e = (jnp.arange(tm)[None, :] // two_n == jnp.arange(tb)[:, None]).astype(jnp.float32)

    def resident(arr):
        return pl.BlockSpec(arr.shape, lambda i: (0, 0))

    in_specs = [
        pl.BlockSpec((tb, 4 * N + 1), lambda i: (i, 0)),  # h01b : per-batch rows, streamed
        pl.BlockSpec((5, tm), lambda i: (0, i)),          # ht   : per-column features, streamed
        resident(e),                                      # expansion matrix, resident
    ] + [resident(p) for p in kparams]                    # all weights/biases resident

    # advisory cost estimate for the XLA scheduler
    per_tile_macs = (
        32 * (4 * N + 1) * tb    # fc_s on TB batch rows (bias folded)
        + 32 * tb * tm           # 0/1 expansion
        + tm * (144 * 5          # fused fc_o + fc0[0] (bias folded)
                + 128 * 48       # fc_c[0]
                + 64 * 128       # fc_c[1]
                + 64             # fc_c[2]
                + 256 * 128      # fc0[1]
                + 64 * 256       # fc1
                + two_n * 64     # fc2
                + two_n))        # value
    cost = pl.CostEstimate(
        flops=int(2 * per_tile_macs * num_blocks),
        transcendentals=0,
        bytes_accessed=int(4 * (h01b.size + ht.size + e.size + m
                                + sum(int(p.size) for p in kparams))))

    out = pl.pallas_call(
        qmix_kernel,
        out_shape=jax.ShapeDtypeStruct((1, m), jnp.float32),
        grid=(num_blocks,),
        in_specs=in_specs,
        out_specs=pl.BlockSpec((1, tm), lambda i: (0, i)),
        compiler_params=pltpu.CompilerParams(
            dimension_semantics=("parallel",),          # shard row blocks across TCs (v7x)
            vmem_limit_bytes=32 * 1024 * 1024),
        cost_estimate=cost,
    )(h01b, ht, e, *kparams)

    return out.reshape(bs, two_n)


# -----------------------------------------------------------------------------
# Pure-JAX reference (mirrors the original PyTorch forward exactly)
# -----------------------------------------------------------------------------
def qmix_forward_ref(obs, feat, params, N):
    (ws_w, ws_b, wo_w, wo_b, wc1_w, wc1_b, wc2_w, wc2_b, wc3_w, wc3_b,
     w0a_w, w0a_b, w0b_w, w0b_b, w1_w, w1_b, w2_w, w2_b, wv_w, wv_b) = params
    bs = obs.shape[0]
    h01 = obs.reshape(bs, -1)
    h11 = feat.reshape(bs, -1)
    h00 = jnp.tile(h01, (1, 2 * N)).reshape(-1, 4 * N)
    h01e = jnp.tile(h01.reshape(-1, 4), (1, 2)).reshape(-1, 4)
    h11e = jnp.tile(h11, (1, N)).reshape(-1, 4)
    h = h01e - h11e
    s = _relu(h00 @ ws_w + ws_b)
    o = _relu(h @ wo_w + wo_b)
    os = jnp.concatenate([s, o], axis=-1)
    c = _relu(os @ wc1_w + wc1_b)
    c = _relu(c @ wc2_w + wc2_b)
    weights = c @ wc3_w + wc3_b
    x = _relu(h @ w0a_w + w0a_b)
    x = _relu(x @ w0b_w + w0b_b)
    x = _relu(x @ w1_w + w1_b)
    x = _relu(x @ w2_w + w2_b)
    q = x @ wv_w + wv_b
    return (q * weights).reshape(bs, -1)


if __name__ == "__main__":
    # Shapes consistent with forward(): obs_space=(N,4) -> obs (B,N,4); feat (B,2,4).
    N = 8
    key = jax.random.PRNGKey(0)
    k_obs, k_feat, k_params, k_obs2, k_feat2 = jax.random.split(key, 5)
    params = init_params(k_params, N)

    # Tolerance note: the kernel computes an algebraically identical but
    # restructured contraction order (transposed layout, fused/split weights,
    # folded biases, 0/1 expansion matmul); with the TPU's default f32 matmul
    # precision this can differ from the XLA reference at the ~1e-3 level, so
    # compare at 1e-2.
    RTOL = ATOL = 1e-2

    # --- small demo (single grid step) ---
    B = 2
    obs = jax.random.normal(k_obs, (B, N, 4), jnp.float32)
    feat = jax.random.normal(k_feat, (B, 2, 4), jnp.float32)
    out = jax.block_until_ready(qmix_forward(obs, feat, params, N))
    ref = jax.block_until_ready(qmix_forward_ref(obs, feat, params, N))
    assert out.shape == (B, 2 * N), out.shape
    assert bool(jnp.allclose(out, ref, rtol=RTOL, atol=ATOL)), \
        float(jnp.max(jnp.abs(out - ref)))

    # --- larger batch: exercises the multi-step pipelined "parallel" grid ---
    B2 = 128                      # -> TB=64 batch rows / 1024 lane-dense columns per step, grid=(2,)
    obs2 = jax.random.normal(k_obs2, (B2, N, 4), jnp.float32)
    feat2 = jax.random.normal(k_feat2, (B2, 2, 4), jnp.float32)
    out2 = jax.block_until_ready(qmix_forward(obs2, feat2, params, N))
    ref2 = jax.block_until_ready(qmix_forward_ref(obs2, feat2, params, N))
    assert out2.shape == (B2, 2 * N), out2.shape
    assert bool(jnp.allclose(out2, ref2, rtol=RTOL, atol=ATOL)), \
        float(jnp.max(jnp.abs(out2 - ref2)))

    print("KERNEL_OK")
</pallas_src>

<mosaic_0001>
module attributes {stable_mosaic.version = 11 : i64} {
  func.func @qmix_kernel(%arg0: i32, %arg1: memref<2x33xf32, #tpu.memory_space<vmem>>, %arg2: memref<5x32xf32, #tpu.memory_space<vmem>>, %arg3: memref<2x32xf32, #tpu.memory_space<vmem>>, %arg4: memref<32x33xf32, #tpu.memory_space<vmem>>, %arg5: memref<144x5xf32, #tpu.memory_space<vmem>>, %arg6: memref<128x32xf32, #tpu.memory_space<vmem>>, %arg7: memref<128x16xf32, #tpu.memory_space<vmem>>, %arg8: memref<128x1xf32, #tpu.memory_space<vmem>>, %arg9: memref<64x128xf32, #tpu.memory_space<vmem>>, %arg10: memref<64x1xf32, #tpu.memory_space<vmem>>, %arg11: memref<1x64xf32, #tpu.memory_space<vmem>>, %arg12: memref<1x1xf32, #tpu.memory_space<vmem>>, %arg13: memref<256x128xf32, #tpu.memory_space<vmem>>, %arg14: memref<256x1xf32, #tpu.memory_space<vmem>>, %arg15: memref<64x256xf32, #tpu.memory_space<vmem>>, %arg16: memref<64x1xf32, #tpu.memory_space<vmem>>, %arg17: memref<16x64xf32, #tpu.memory_space<vmem>>, %arg18: memref<16x1xf32, #tpu.memory_space<vmem>>, %arg19: memref<1x16xf32, #tpu.memory_space<vmem>>, %arg20: memref<1x1xf32, #tpu.memory_space<vmem>>, %arg21: memref<1x32xf32, #tpu.memory_space<vmem>>) attributes {dimension_semantics = [#tpu.dimension_semantics<parallel>], iteration_bounds = array<i64: 1>, scalar_prefetch = 0 : i64, scratch_operands = 0 : i64, tpu.core_type = #tpu.core_type<tc>, window_params = [{transform_indices = @transform_0, window_bounds = array<i64: 2, 33>}, {transform_indices = @transform_1, window_bounds = array<i64: 5, 32>}, {pipeline_mode = #tpu.pipeline_mode<synchronous>, transform_indices = @transform_2, window_bounds = array<i64: 2, 32>}, {pipeline_mode = #tpu.pipeline_mode<synchronous>, transform_indices = @transform_3, window_bounds = array<i64: 32, 33>}, {pipeline_mode = #tpu.pipeline_mode<synchronous>, transform_indices = @transform_4, window_bounds = array<i64: 144, 5>}, {pipeline_mode = #tpu.pipeline_mode<synchronous>, transform_indices = @transform_5, window_bounds = array<i64: 128, 32>}, {pipeline_mode = #tpu.pipeline_mode<synchronous>, transform_indices = @transform_6, window_bounds = array<i64: 128, 16>}, {pipeline_mode = #tpu.pipeline_mode<synchronous>, transform_indices = @transform_7, window_bounds = array<i64: 128, 1>}, {pipeline_mode = #tpu.pipeline_mode<synchronous>, transform_indices = @transform_8, window_bounds = array<i64: 64, 128>}, {pipeline_mode = #tpu.pipeline_mode<synchronous>, transform_indices = @transform_9, window_bounds = array<i64: 64, 1>}, {pipeline_mode = #tpu.pipeline_mode<synchronous>, transform_indices = @transform_10, window_bounds = array<i64: 1, 64>}, {pipeline_mode = #tpu.pipeline_mode<synchronous>, transform_indices = @transform_11, window_bounds = array<i64: 1, 1>}, {pipeline_mode = #tpu.pipeline_mode<synchronous>, transform_indices = @transform_12, window_bounds = array<i64: 256, 128>}, {pipeline_mode = #tpu.pipeline_mode<synchronous>, transform_indices = @transform_13, window_bounds = array<i64: 256, 1>}, {pipeline_mode = #tpu.pipeline_mode<synchronous>, transform_indices = @transform_14, window_bounds = array<i64: 64, 256>}, {pipeline_mode = #tpu.pipeline_mode<synchronous>, transform_indices = @transform_15, window_bounds = array<i64: 64, 1>}, {pipeline_mode = #tpu.pipeline_mode<synchronous>, transform_indices = @transform_16, window_bounds = array<i64: 16, 64>}, {pipeline_mode = #tpu.pipeline_mode<synchronous>, transform_indices = @transform_17, window_bounds = array<i64: 16, 1>}, {pipeline_mode = #tpu.pipeline_mode<synchronous>, transform_indices = @transform_18, window_bounds = array<i64: 1, 16>}, {pipeline_mode = #tpu.pipeline_mode<synchronous>, transform_indices = @transform_19, window_bounds = array<i64: 1, 1>}, {transform_indices = @transform_20, window_bounds = array<i64: 1, 32>}]} {
    %c0 = arith.constant 0 : index
    %c0_0 = arith.constant 0 : index
    %0 = vector.load %arg1[%c0, %c0_0] : memref<2x33xf32, #tpu.memory_space<vmem>>, vector<2x33xf32>
    %c0_1 = arith.constant 0 : index
    %c0_2 = arith.constant 0 : index
    %1 = vector.load %arg2[%c0_1, %c0_2] : memref<5x32xf32, #tpu.memory_space<vmem>>, vector<5x32xf32>
    %c0_3 = arith.constant 0 : index
    %c0_4 = arith.constant 0 : index
    %2 = vector.load %arg3[%c0_3, %c0_4] : memref<2x32xf32, #tpu.memory_space<vmem>>, vector<2x32xf32>
    %c0_5 = arith.constant 0 : index
    %c0_6 = arith.constant 0 : index
    %3 = vector.load %arg4[%c0_5, %c0_6] : memref<32x33xf32, #tpu.memory_space<vmem>>, vector<32x33xf32>
    %cst = arith.constant dense<0.000000e+00> : vector<32x2xf32>
    %4 = tpu.matmul %3, %0, %cst {dimension_numbers = #tpu.dot_dimension_numbers<[1], [1], [0], [0], [0, 0, 1, 0], [], []>} : vector<32x33xf32>, vector<2x33xf32>, vector<32x2xf32> -> vector<32x2xf32>
    %cst_7 = arith.constant 0.000000e+00 : f32
    %5 = vector.broadcast %cst_7 : f32 to vector<32x2xf32>
    %6 = arith.maximumf %4, %5 : vector<32x2xf32>
    %cst_8 = arith.constant dense<0.000000e+00> : vector<32x32xf32>
    %7 = tpu.matmul %6, %2, %cst_8 {dimension_numbers = #tpu.dot_dimension_numbers<[1], [0], [0], [1], [0, 0, 1, 1], [], []>} : vector<32x2xf32>, vector<2x32xf32>, vector<32x32xf32> -> vector<32x32xf32>
    %c0_9 = arith.constant 0 : index
    %c0_10 = arith.constant 0 : index
    %8 = vector.load %arg5[%c0_9, %c0_10] : memref<144x5xf32, #tpu.memory_space<vmem>>, vector<144x5xf32>
    %cst_11 = arith.constant dense<0.000000e+00> : vector<144x32xf32>
    %9 = tpu.matmul %8, %1, %cst_11 {dimension_numbers = #tpu.dot_dimension_numbers<[1], [0], [0], [1], [0, 0, 1, 1], [], []>} : vector<144x5xf32>, vector<5x32xf32>, vector<144x32xf32> -> vector<144x32xf32>
    %cst_12 = arith.constant 0.000000e+00 : f32
    %10 = vector.broadcast %cst_12 : f32 to vector<144x32xf32>
    %11 = arith.maximumf %9, %10 : vector<144x32xf32>
    %12 = vector.extract_strided_slice %11 {offsets = [0, 0], sizes = [16, 32], strides = [1, 1]} : vector<144x32xf32> to vector<16x32xf32>
    %13 = vector.extract_strided_slice %11 {offsets = [16, 0], sizes = [128, 32], strides = [1, 1]} : vector<144x32xf32> to vector<128x32xf32>
    %c0_13 = arith.constant 0 : index
    %c0_14 = arith.constant 0 : index
    %14 = vector.load %arg6[%c0_13, %c0_14] : memref<128x32xf32, #tpu.memory_space<vmem>>, vector<128x32xf32>
    %cst_15 = arith.constant dense<0.000000e+00> : vector<128x32xf32>
    %15 = tpu.matmul %14, %7, %cst_15 {dimension_numbers = #tpu.dot_dimension_numbers<[1], [0], [0], [1], [0, 0, 1, 1], [], []>} : vector<128x32xf32>, vector<32x32xf32>, vector<128x32xf32> -> vector<128x32xf32>
    %c0_16 = arith.constant 0 : index
    %c0_17 = arith.constant 0 : index
    %16 = vector.load %arg7[%c0_16, %c0_17] : memref<128x16xf32, #tpu.memory_space<vmem>>, vector<128x16xf32>
    %cst_18 = arith.constant dense<0.000000e+00> : vector<128x32xf32>
    %17 = tpu.matmul %16, %12, %cst_18 {dimension_numbers = #tpu.dot_dimension_numbers<[1], [0], [0], [1], [0, 0, 1, 1], [], []>} : vector<128x16xf32>, vector<16x32xf32>, vector<128x32xf32> -> vector<128x32xf32>
    %18 = arith.addf %15, %17 : vector<128x32xf32>
    %c0_19 = arith.constant 0 : index
    %c0_20 = arith.constant 0 : index
    %19 = vector.load %arg8[%c0_19, %c0_20] : memref<128x1xf32, #tpu.memory_space<vmem>>, vector<128x1xf32>
    %20 = vector.broadcast %19 : vector<128x1xf32> to vector<128x32xf32>
    %21 = arith.addf %18, %20 : vector<128x32xf32>
    %cst_21 = arith.constant 0.000000e+00 : f32
    %22 = vector.broadcast %cst_21 : f32 to vector<128x32xf32>
    %23 = arith.maximumf %21, %22 : vector<128x32xf32>
    %c0_22 = arith.constant 0 : index
    %c0_23 = arith.constant 0 : index
    %24 = vector.load %arg9[%c0_22, %c0_23] : memref<64x128xf32, #tpu.memory_space<vmem>>, vector<64x128xf32>
    %cst_24 = arith.constant dense<0.000000e+00> : vector<64x32xf32>
    %25 = tpu.matmul %24, %23, %cst_24 {dimension_numbers = #tpu.dot_dimension_numbers<[1], [0], [0], [1], [0, 0, 1, 1], [], []>} : vector<64x128xf32>, vector<128x32xf32>, vector<64x32xf32> -> vector<64x32xf32>
    %c0_25 = arith.constant 0 : index
    %c0_26 = arith.constant 0 : index
    %26 = vector.load %arg10[%c0_25, %c0_26] : memref<64x1xf32, #tpu.memory_space<vmem>>, vector<64x1xf32>
    %27 = vector.broadcast %26 : vector<64x1xf32> to vector<64x32xf32>
    %28 = arith.addf %25, %27 : vector<64x32xf32>
    %cst_27 = arith.constant 0.000000e+00 : f32
    %29 = vector.broadcast %cst_27 : f32 to vector<64x32xf32>
    %30 = arith.maximumf %28, %29 : vector<64x32xf32>
    %c0_28 = arith.constant 0 : index
    %c0_29 = arith.constant 0 : index
    %31 = vector.load %arg11[%c0_28, %c0_29] : memref<1x64xf32, #tpu.memory_space<vmem>>, vector<1x64xf32>
    %cst_30 = arith.constant dense<0.000000e+00> : vector<1x32xf32>
    %32 = tpu.matmul %31, %30, %cst_30 {dimension_numbers = #tpu.dot_dimension_numbers<[1], [0], [0], [1], [0, 0, 1, 1], [], []>} : vector<1x64xf32>, vector<64x32xf32>, vector<1x32xf32> -> vector<1x32xf32>
    %c0_31 = arith.constant 0 : index
    %c0_32 = arith.constant 0 : index
    %33 = vector.load %arg12[%c0_31, %c0_32] : memref<1x1xf32, #tpu.memory_space<vmem>>, vector<1x1xf32>
    %34 = vector.broadcast %33 : vector<1x1xf32> to vector<1x32xf32>
    %35 = arith.addf %32, %34 : vector<1x32xf32>
    %c0_33 = arith.constant 0 : index
    %c0_34 = arith.constant 0 : index
    %36 = vector.load %arg13[%c0_33, %c0_34] : memref<256x128xf32, #tpu.memory_space<vmem>>, vector<256x128xf32>
    %cst_35 = arith.constant dense<0.000000e+00> : vector<256x32xf32>
    %37 = tpu.matmul %36, %13, %cst_35 {dimension_numbers = #tpu.dot_dimension_numbers<[1], [0], [0], [1], [0, 0, 1, 1], [], []>} : vector<256x128xf32>, vector<128x32xf32>, vector<256x32xf32> -> vector<256x32xf32>
    %c0_36 = arith.constant 0 : index
    %c0_37 = arith.constant 0 : index
    %38 = vector.load %arg14[%c0_36, %c0_37] : memref<256x1xf32, #tpu.memory_space<vmem>>, vector<256x1xf32>
    %39 = vector.broadcast %38 : vector<256x1xf32> to vector<256x32xf32>
    %40 = arith.addf %37, %39 : vector<256x32xf32>
    %cst_38 = arith.constant 0.000000e+00 : f32
    %41 = vector.broadcast %cst_38 : f32 to vector<256x32xf32>
    %42 = arith.maximumf %40, %41 : vector<256x32xf32>
    %c0_39 = arith.constant 0 : index
    %c0_40 = arith.constant 0 : index
    %43 = vector.load %arg15[%c0_39, %c0_40] : memref<64x256xf32, #tpu.memory_space<vmem>>, vector<64x256xf32>
    %cst_41 = arith.constant dense<0.000000e+00> : vector<64x32xf32>
    %44 = tpu.matmul %43, %42, %cst_41 {dimension_numbers = #tpu.dot_dimension_numbers<[1], [0], [0], [1], [0, 0, 1, 1], [], []>} : vector<64x256xf32>, vector<256x32xf32>, vector<64x32xf32> -> vector<64x32xf32>
    %c0_42 = arith.constant 0 : index
    %c0_43 = arith.constant 0 : index
    %45 = vector.load %arg16[%c0_42, %c0_43] : memref<64x1xf32, #tpu.memory_space<vmem>>, vector<64x1xf32>
    %46 = vector.broadcast %45 : vector<64x1xf32> to vector<64x32xf32>
    %47 = arith.addf %44, %46 : vector<64x32xf32>
    %cst_44 = arith.constant 0.000000e+00 : f32
    %48 = vector.broadcast %cst_44 : f32 to vector<64x32xf32>
    %49 = arith.maximumf %47, %48 : vector<64x32xf32>
    %c0_45 = arith.constant 0 : index
    %c0_46 = arith.constant 0 : index
    %50 = vector.load %arg17[%c0_45, %c0_46] : memref<16x64xf32, #tpu.memory_space<vmem>>, vector<16x64xf32>
    %cst_47 = arith.constant dense<0.000000e+00> : vector<16x32xf32>
    %51 = tpu.matmul %50, %49, %cst_47 {dimension_numbers = #tpu.dot_dimension_numbers<[1], [0], [0], [1], [0, 0, 1, 1], [], []>} : vector<16x64xf32>, vector<64x32xf32>, vector<16x32xf32> -> vector<16x32xf32>
    %c0_48 = arith.constant 0 : index
    %c0_49 = arith.constant 0 : index
    %52 = vector.load %arg18[%c0_48, %c0_49] : memref<16x1xf32, #tpu.memory_space<vmem>>, vector<16x1xf32>
    %53 = vector.broadcast %52 : vector<16x1xf32> to vector<16x32xf32>
    %54 = arith.addf %51, %53 : vector<16x32xf32>
    %cst_50 = arith.constant 0.000000e+00 : f32
    %55 = vector.broadcast %cst_50 : f32 to vector<16x32xf32>
    %56 = arith.maximumf %54, %55 : vector<16x32xf32>
    %c0_51 = arith.constant 0 : index
    %c0_52 = arith.constant 0 : index
    %57 = vector.load %arg19[%c0_51, %c0_52] : memref<1x16xf32, #tpu.memory_space<vmem>>, vector<1x16xf32>
    %cst_53 = arith.constant dense<0.000000e+00> : vector<1x32xf32>
    %58 = tpu.matmul %57, %56, %cst_53 {dimension_numbers = #tpu.dot_dimension_numbers<[1], [0], [0], [1], [0, 0, 1, 1], [], []>} : vector<1x16xf32>, vector<16x32xf32>, vector<1x32xf32> -> vector<1x32xf32>
    %c0_54 = arith.constant 0 : index
    %c0_55 = arith.constant 0 : index
    %59 = vector.load %arg20[%c0_54, %c0_55] : memref<1x1xf32, #tpu.memory_space<vmem>>, vector<1x1xf32>
    %60 = vector.broadcast %59 : vector<1x1xf32> to vector<1x32xf32>
    %61 = arith.addf %58, %60 : vector<1x32xf32>
    %62 = arith.mulf %61, %35 : vector<1x32xf32>
    %c0_56 = arith.constant 0 : index
    %c0_57 = arith.constant 0 : index
    %63 = vector.load %arg21[%c0_56, %c0_57] : memref<1x32xf32, #tpu.memory_space<vmem>>, vector<1x32xf32>
    tpu.vector_store %arg21[%c0_56, %c0_57], %62 {strides = array<i32>} : memref<1x32xf32, #tpu.memory_space<vmem>>, vector<1x32xf32>,
    return
  }
  func.func @transform_0(%arg0: i32) -> (i32, i32) {
    %c0_i32 = arith.constant 0 : i32
    %c0_i32_0 = arith.constant 0 : i32
    return %arg0, %c0_i32 : i32, i32
  }
  func.func @transform_1(%arg0: i32) -> (i32, i32) {
    %c0_i32 = arith.constant 0 : i32
    %c0_i32_0 = arith.constant 0 : i32
    return %c0_i32, %arg0 : i32, i32
  }
  func.func @transform_2(%arg0: i32) -> (i32, i32) {
    %c0_i32 = arith.constant 0 : i32
    %c0_i32_0 = arith.constant 0 : i32
    %c0_i32_1 = arith.constant 0 : i32
    return %c0_i32, %c0_i32_0 : i32, i32
  }
  func.func @transform_3(%arg0: i32) -> (i32, i32) {
    %c0_i32 = arith.constant 0 : i32
    %c0_i32_0 = arith.constant 0 : i32
    %c0_i32_1 = arith.constant 0 : i32
    return %c0_i32, %c0_i32_0 : i32, i32
  }
  func.func @transform_4(%arg0: i32) -> (i32, i32) {
    %c0_i32 = arith.constant 0 : i32
    %c0_i32_0 = arith.constant 0 : i32
    %c0_i32_1 = arith.constant 0 : i32
    return %c0_i32, %c0_i32_0 : i32, i32
  }
  func.func @transform_5(%arg0: i32) -> (i32, i32) {
    %c0_i32 = arith.constant 0 : i32
    %c0_i32_0 = arith.constant 0 : i32
    %c0_i32_1 = arith.constant 0 : i32
    return %c0_i32, %c0_i32_0 : i32, i32
  }
  func.func @transform_6(%arg0: i32) -> (i32, i32) {
    %c0_i32 = arith.constant 0 : i32
    %c0_i32_0 = arith.constant 0 : i32
    %c0_i32_1 = arith.constant 0 : i32
    return %c0_i32, %c0_i32_0 : i32, i32
  }
  func.func @transform_7(%arg0: i32) -> (i32, i32) {
    %c0_i32 = arith.constant 0 : i32
    %c0_i32_0 = arith.constant 0 : i32
    %c0_i32_1 = arith.constant 0 : i32
    return %c0_i32, %c0_i32_0 : i32, i32
  }
  func.func @transform_8(%arg0: i32) -> (i32, i32) {
    %c0_i32 = arith.constant 0 : i32
    %c0_i32_0 = arith.constant 0 : i32
    %c0_i32_1 = arith.constant 0 : i32
    return %c0_i32, %c0_i32_0 : i32, i32
  }
  func.func @transform_9(%arg0: i32) -> (i32, i32) {
    %c0_i32 = arith.constant 0 : i32
    %c0_i32_0 = arith.constant 0 : i32
    %c0_i32_1 = arith.constant 0 : i32
    return %c0_i32, %c0_i32_0 : i32, i32
  }
  func.func @transform_10(%arg0: i32) -> (i32, i32) {
    %c0_i32 = arith.constant 0 : i32
    %c0_i32_0 = arith.constant 0 : i32
    %c0_i32_1 = arith.constant 0 : i32
    return %c0_i32, %c0_i32_0 : i32, i32
  }
  func.func @transform_11(%arg0: i32) -> (i32, i32) {
    %c0_i32 = arith.constant 0 : i32
    %c0_i32_0 = arith.constant 0 : i32
    %c0_i32_1 = arith.constant 0 : i32
    return %c0_i32, %c0_i32_0 : i32, i32
  }
  func.func @transform_12(%arg0: i32) -> (i32, i32) {
    %c0_i32 = arith.constant 0 : i32
    %c0_i32_0 = arith.constant 0 : i32
    %c0_i32_1 = arith.constant 0 : i32
    return %c0_i32, %c0_i32_0 : i32, i32
  }
  func.func @transform_13(%arg0: i32) -> (i32, i32) {
    %c0_i32 = arith.constant 0 : i32
    %c0_i32_0 = arith.constant 0 : i32
    %c0_i32_1 = arith.constant 0 : i32
    return %c0_i32, %c0_i32_0 : i32, i32
  }
  func.func @transform_14(%arg0: i32) -> (i32, i32) {
    %c0_i32 = arith.constant 0 : i32
    %c0_i32_0 = arith.constant 0 : i32
    %c0_i32_1 = arith.constant 0 : i32
    return %c0_i32, %c0_i32_0 : i32, i32
  }
  func.func @transform_15(%arg0: i32) -> (i32, i32) {
    %c0_i32 = arith.constant 0 : i32
    %c0_i32_0 = arith.constant 0 : i32
    %c0_i32_1 = arith.constant 0 : i32
    return %c0_i32, %c0_i32_0 : i32, i32
  }
  func.func @transform_16(%arg0: i32) -> (i32, i32) {
    %c0_i32 = arith.constant 0 : i32
    %c0_i32_0 = arith.constant 0 : i32
    %c0_i32_1 = arith.constant 0 : i32
    return %c0_i32, %c0_i32_0 : i32, i32
  }
  func.func @transform_17(%arg0: i32) -> (i32, i32) {
    %c0_i32 = arith.constant 0 : i32
    %c0_i32_0 = arith.constant 0 : i32
    %c0_i32_1 = arith.constant 0 : i32
    return %c0_i32, %c0_i32_0 : i32, i32
  }
  func.func @transform_18(%arg0: i32) -> (i32, i32) {
    %c0_i32 = arith.constant 0 : i32
    %c0_i32_0 = arith.constant 0 : i32
    %c0_i32_1 = arith.constant 0 : i32
    return %c0_i32, %c0_i32_0 : i32, i32
  }
  func.func @transform_19(%arg0: i32) -> (i32, i32) {
    %c0_i32 = arith.constant 0 : i32
    %c0_i32_0 = arith.constant 0 : i32
    %c0_i32_1 = arith.constant 0 : i32
    return %c0_i32, %c0_i32_0 : i32, i32
  }
  func.func @transform_20(%arg0: i32) -> (i32, i32) {
    %c0_i32 = arith.constant 0 : i32
    %c0_i32_0 = arith.constant 0 : i32
    return %c0_i32, %arg0 : i32, i32
  }
}

</mosaic_0001>

<llo_original>
// kernel: tpu_custom_call.1
$region0: #{tpu_custom_call.1}
  #allocation0 [shape = 'u32[]', space=smem, size = 0x4, offset = 0x4, fixed_abs, tag = 'smem constant byte address 0x4 - core index']
  #allocation1 [shape = 'u32[72,128]{1,0:T(1,128)}', space=vmem, size = 0x9000, scoped, tag = 'internal scratch']
  #allocation2 [shape = 'f32[1,1]{1,0:T(1,128)S(1)}', space=vmem, size = 0x200, scoped, tag = 'scoped memory for tpu_custom_call.1']
  #allocation3 [shape = 'f32[1,1]{1,0:T(1,128)S(1)}', space=vmem, size = 0x200, scoped, tag = 'scoped memory for tpu_custom_call.1']
  %s0 = inlined_call_operand.vmem [shape: f32[2,33], index: 0, kind: input, shape index: {}]
  %s1 = inlined_call_operand.vmem [shape: f32[5,32], index: 1, kind: input, shape index: {}]
  %s2 = inlined_call_operand.vmem [shape: f32[2,32], index: 2, kind: input, shape index: {}]
  %s3 = inlined_call_operand.vmem [shape: f32[32,33], index: 3, kind: input, shape index: {}]
  %s4 = inlined_call_operand.vmem [shape: f32[144,5], index: 4, kind: input, shape index: {}]
  %s5 = inlined_call_operand.vmem [shape: f32[128,32], index: 5, kind: input, shape index: {}]
  %s6 = inlined_call_operand.vmem [shape: f32[128,16], index: 6, kind: input, shape index: {}]
  %s7 = inlined_call_operand.vmem [shape: f32[128,1], index: 7, kind: input, shape index: {}]
  %s8 = inlined_call_operand.vmem [shape: f32[64,128], index: 8, kind: input, shape index: {}]
  %s9 = inlined_call_operand.vmem [shape: f32[64,1], index: 9, kind: input, shape index: {}]
  %s10 = inlined_call_operand.vmem [shape: f32[1,64], index: 10, kind: input, shape index: {}]
  %s11 = inlined_call_operand.<no memory space> [shape: f32[1,1], index: 11, kind: input, shape index: {}]
  %s12 = inlined_call_operand.vmem [shape: f32[256,128], index: 12, kind: input, shape index: {}]
  %s13 = inlined_call_operand.vmem [shape: f32[256,1], index: 13, kind: input, shape index: {}]
  %s14 = inlined_call_operand.vmem [shape: f32[64,256], index: 14, kind: input, shape index: {}]
  %s15 = inlined_call_operand.vmem [shape: f32[64,1], index: 15, kind: input, shape index: {}]
  %s16 = inlined_call_operand.vmem [shape: f32[16,64], index: 16, kind: input, shape index: {}]
  %s17 = inlined_call_operand.vmem [shape: f32[16,1], index: 17, kind: input, shape index: {}]
  %s18 = inlined_call_operand.vmem [shape: f32[1,16], index: 18, kind: input, shape index: {}]
  %s19 = inlined_call_operand.<no memory space> [shape: f32[1,1], index: 19, kind: input, shape index: {}]
  %s20 = inlined_call_operand.hbm [shape: f32[1,32], index: 20, kind: output, shape index: {}]
  %s21 = sld [smem:[#allocation0]]
  $region90: #{tpu_custom_call.1} parent=0
    _
  %s23 = ssub.s32 1, %s21
  %s24 = scalar_select 0, %s23, %s21
  %v25 = vstv %s11
  %26 = vst [vmem:[#allocation2] sm:$0x1] %v25
  %v27 = vstv %s19
  %28 = vst [vmem:[#allocation3] sm:$0x1] %v27
  $region1: #{tpu_custom_call.1} parent=0
    #allocation4 [shape = 'u8[512]{0}', space=vmem, size = 0x400, scoped, tag = 'output window, operand 0, single buffered']
    #allocation5 [shape = 's32[1]{0}', space=sflag, size = 0x4, scoped, tag = 'scoped memory for tpu_custom_call.1']
    %29 = vsyncpa [#allocation5], 0
    // Predicated region
    $region2: #{tpu_custom_call.1} parent=1 // pred_check
      _
    $region3: #{tpu_custom_call.1} parent=1 // pred_check_branch
      %31 = sbr.rel (0) target = $region5
    $region4: #{tpu_custom_call.1} parent=1 // pred_region
      _
    $region5: #{tpu_custom_call.1} parent=1 // pred_fallthru
      _
    // Predicated region
    $region6: #{tpu_custom_call.1} parent=1 // pred_check
      _
    $region7: #{tpu_custom_call.1} parent=1 // pred_check_branch
      %33 = sbr.rel (0) target = $region9
    $region8: #{tpu_custom_call.1} parent=1 // pred_region
      _
    $region9: #{tpu_custom_call.1} parent=1 // pred_fallthru
      _
    // Predicated region
    $region10: #{tpu_custom_call.1} parent=1 // pred_check
      _
    $region11: #{tpu_custom_call.1} parent=1 // pred_check_branch
      %35 = sbr.rel (0) target = $region13
    $region12: #{tpu_custom_call.1} parent=1 // pred_region
      _
    $region13: #{tpu_custom_call.1} parent=1 // pred_fallthru
      _
    // Predicated region
    $region14: #{tpu_custom_call.1} parent=1 // pred_check
      _
    $region15: #{tpu_custom_call.1} parent=1 // pred_check_branch
      %37 = sbr.rel (0) target = $region17
    $region16: #{tpu_custom_call.1} parent=1 // pred_region
      _
    $region17: #{tpu_custom_call.1} parent=1 // pred_fallthru
      _
    // Predicated region
    $region18: #{tpu_custom_call.1} parent=1 // pred_check
      _
    $region19: #{tpu_custom_call.1} parent=1 // pred_check_branch
      %39 = sbr.rel (0) target = $region21
    $region20: #{tpu_custom_call.1} parent=1 // pred_region
      _
    $region21: #{tpu_custom_call.1} parent=1 // pred_fallthru
      _
    // Predicated region
    $region22: #{tpu_custom_call.1} parent=1 // pred_check
      _
    $region23: #{tpu_custom_call.1} parent=1 // pred_check_branch
      %41 = sbr.rel (0) target = $region25
    $region24: #{tpu_custom_call.1} parent=1 // pred_region
      _
    $region25: #{tpu_custom_call.1} parent=1 // pred_fallthru
      _
    // Predicated region
    $region26: #{tpu_custom_call.1} parent=1 // pred_check
      _
    $region27: #{tpu_custom_call.1} parent=1 // pred_check_branch
      %43 = sbr.rel (0) target = $region29
    $region28: #{tpu_custom_call.1} parent=1 // pred_region
      _
    $region29: #{tpu_custom_call.1} parent=1 // pred_fallthru
      _
    // Predicated region
    $region30: #{tpu_custom_call.1} parent=1 // pred_check
      _
    $region31: #{tpu_custom_call.1} parent=1 // pred_check_branch
      %45 = sbr.rel (0) target = $region33
    $region32: #{tpu_custom_call.1} parent=1 // pred_region
      _
    $region33: #{tpu_custom_call.1} parent=1 // pred_fallthru
      _
    // Predicated region
    $region34: #{tpu_custom_call.1} parent=1 // pred_check
      _
    $region35: #{tpu_custom_call.1} parent=1 // pred_check_branch
      %47 = sbr.rel (0) target = $region37
    $region36: #{tpu_custom_call.1} parent=1 // pred_region
      _
    $region37: #{tpu_custom_call.1} parent=1 // pred_fallthru
      _
    // Predicated region
    $region38: #{tpu_custom_call.1} parent=1 // pred_check
      _
    $region39: #{tpu_custom_call.1} parent=1 // pred_check_branch
      %49 = sbr.rel (0) target = $region41
    $region40: #{tpu_custom_call.1} parent=1 // pred_region
      _
    $region41: #{tpu_custom_call.1} parent=1 // pred_fallthru
      _
    // Predicated region
    $region42: #{tpu_custom_call.1} parent=1 // pred_check
      _
    $region43: #{tpu_custom_call.1} parent=1 // pred_check_branch
      %51 = sbr.rel (0) target = $region45
    $region44: #{tpu_custom_call.1} parent=1 // pred_region
      _
    $region45: #{tpu_custom_call.1} parent=1 // pred_fallthru
      _
    // Predicated region
    $region46: #{tpu_custom_call.1} parent=1 // pred_check
      _
    $region47: #{tpu_custom_call.1} parent=1 // pred_check_branch
      %53 = sbr.rel (0) target = $region49
    $region48: #{tpu_custom_call.1} parent=1 // pred_region
      _
    $region49: #{tpu_custom_call.1} parent=1 // pred_fallthru
      _
    // Predicated region
    $region50: #{tpu_custom_call.1} parent=1 // pred_check
      _
    $region51: #{tpu_custom_call.1} parent=1 // pred_check_branch
      %55 = sbr.rel (0) target = $region53
    $region52: #{tpu_custom_call.1} parent=1 // pred_region
      _
    $region53: #{tpu_custom_call.1} parent=1 // pred_fallthru
      _
    // Predicated region
    $region54: #{tpu_custom_call.1} parent=1 // pred_check
      _
    $region55: #{tpu_custom_call.1} parent=1 // pred_check_branch
      %57 = sbr.rel (0) target = $region57
    $region56: #{tpu_custom_call.1} parent=1 // pred_region
      _
    $region57: #{tpu_custom_call.1} parent=1 // pred_fallthru
      _
    // Predicated region
    $region58: #{tpu_custom_call.1} parent=1 // pred_check
      _
    $region59: #{tpu_custom_call.1} parent=1 // pred_check_branch
      %59 = sbr.rel (0) target = $region61
    $region60: #{tpu_custom_call.1} parent=1 // pred_region
      _
    $region61: #{tpu_custom_call.1} parent=1 // pred_fallthru
      _
    // Predicated region
    $region62: #{tpu_custom_call.1} parent=1 // pred_check
      _
    $region63: #{tpu_custom_call.1} parent=1 // pred_check_branch
      %61 = sbr.rel (0) target = $region65
    $region64: #{tpu_custom_call.1} parent=1 // pred_region
      _
    $region65: #{tpu_custom_call.1} parent=1 // pred_fallthru
      _
    // Predicated region
    $region66: #{tpu_custom_call.1} parent=1 // pred_check
      _
    $region67: #{tpu_custom_call.1} parent=1 // pred_check_branch
      %63 = sbr.rel (0) target = $region69
    $region68: #{tpu_custom_call.1} parent=1 // pred_region
      _
    $region69: #{tpu_custom_call.1} parent=1 // pred_fallthru
      _
    // Predicated region
    $region70: #{tpu_custom_call.1} parent=1 // pred_check
      _
    $region71: #{tpu_custom_call.1} parent=1 // pred_check_branch
      %65 = sbr.rel (0) target = $region73
    $region72: #{tpu_custom_call.1} parent=1 // pred_region
      _
    $region73: #{tpu_custom_call.1} parent=1 // pred_fallthru
      _
    // Predicated region
    $region74: #{tpu_custom_call.1} parent=1 // pred_check
      _
    $region75: #{tpu_custom_call.1} parent=1 // pred_check_branch
      %67 = sbr.rel (0) target = $region77
    $region76: #{tpu_custom_call.1} parent=1 // pred_region
      _
    $region77: #{tpu_custom_call.1} parent=1 // pred_fallthru
      _
    // Predicated region
    $region78: #{tpu_custom_call.1} parent=1 // pred_check
      _
    $region79: #{tpu_custom_call.1} parent=1 // pred_check_branch
      %69 = sbr.rel (0) target = $region81
    $region80: #{tpu_custom_call.1} parent=1 // pred_region
      _
    $region81: #{tpu_custom_call.1} parent=1 // pred_fallthru
      _
    %v70 = vld [vmem:[%s0] sm:$0x3]
    %v71 = vld [vmem:[%s1] sm:$0x1f]
    %v72 = vld [vmem:[%s2] sm:$0x3]
    %v73 = vld [vmem:[%s3] sm:$0xff]
    %v74 = vld [vmem:[%s3 + $0x8] sm:$0xff]
    %v75 = vld [vmem:[%s3 + $0x10] sm:$0xff]
    %v76 = vld [vmem:[%s3 + $0x18] sm:$0xff]
    %vm77 = vcmask 269312
    %v79 = vsel %vm77, %v73, 0
    %v82 = vsel %vm77, %v74, 0
    %v85 = vsel %vm77, %v75, 0
    %v88 = vsel %vm77, %v76, 0
    %v91 = vsel %vm77, %v70, 0
    %93 = vmatpush.xpose.msra.mxu0 0.0
    %94 = vmatpush.xpose.msra.mxu0 0.0
    %95 = vmatpush.xpose.msra.mxu0 0.0
    %96 = vmatpush.xpose.msra.mxu0 0.0
    %97 = vmatpush.xpose.msra.mxu0 0.0
    %98 = vmatpush.xpose.msra.mxu0 0.0
    %99 = vmatpush.xpose.msra.mxu0 0.0
    %100 = vmatpush.xpose.msra.mxu0 0.0
    %101 = vmatpush.xpose.msra.mxu0 0.0
    %102 = vmatpush.xpose.msra.mxu0 0.0
    %103 = vmatpush.xpose.msra.mxu0 0.0
    %104 = vmatpush.xpose.msra.mxu0 0.0
    %105 = vmatpush.xpose.msra.mxu0 0.0
    %106 = vmatpush.xpose.msra.mxu0 0.0
    %107 = vmatpush.xpose.msra.mxu0 0.0
    %108 = vmatpush.xpose.msra.mxu0 %v91
    %109 = vmatmul.f32.gmra.mxu0 %v79
    %v110 = vpop.f32.mrf.mxu0
    %v111 = vadd.f32 0.0, %v110
    %112 = vmatmul.f32.gmra.mxu0 %v82
    %v113 = vpop.f32.mrf.mxu0
    %v114 = vadd.f32 0.0, %v113
    %115 = vmatmul.f32.gmra.mxu0 %v85
    %v116 = vpop.f32.mrf.mxu0
    %v117 = vadd.f32 0.0, %v116
    %118 = vmatmul.f32.gmra.mxu0 %v88
    %v119 = vpop.f32.mrf.mxu0
    %v120 = vadd.f32 0.0, %v119
    %121 = vdwg.mxu0
    %v122 = vmax.f32 %v111, 0.0
    %v123 = vmax.f32 %v114, 0.0
    %v124 = vmax.f32 %v117, 0.0
    %v125 = vmax.f32 %v120, 0.0
    %vm126 = vcmask 15360
    %v128 = vsel %vm126, %v122, 0
    %v131 = vsel %vm126, %v123, 0
    %v134 = vsel %vm126, %v124, 0
    %v137 = vsel %vm126, %v125, 0
    %vm139 = vcmask 1041408
    %v141 = vsel %vm139, %v72, 0
    %143 = vmatpush.msra.mxu0 0.0
    %144 = vmatpush.msra.mxu0 0.0
    %145 = vmatpush.msra.mxu0 0.0
    %146 = vmatpush.msra.mxu0 0.0
    %147 = vmatpush.msra.mxu0 0.0
    %148 = vmatpush.msra.mxu0 0.0
    %149 = vmatpush.msra.mxu0 0.0
    %150 = vmatpush.msra.mxu0 0.0
    %151 = vmatpush.msra.mxu0 0.0
    %152 = vmatpush.msra.mxu0 0.0
    %153 = vmatpush.msra.mxu0 0.0
    %154 = vmatpush.msra.mxu0 0.0
    %155 = vmatpush.msra.mxu0 0.0
    %156 = vmatpush.msra.mxu0 0.0
    %157 = vmatpush.msra.mxu0 0.0
    %158 = vmatpush.msra.mxu0 %v141
    %159 = vmatmul.f32.gmra.mxu0 %v128
    %v160 = vpop.f32.mrf.mxu0
    %v161 = vadd.f32 0.0, %v160
    %162 = vmatmul.f32.gmra.mxu0 %v131
    %v163 = vpop.f32.mrf.mxu0
    %v164 = vadd.f32 0.0, %v163
    %165 = vmatmul.f32.gmra.mxu0 %v134
    %v166 = vpop.f32.mrf.mxu0
    %v167 = vadd.f32 0.0, %v166
    %168 = vmatmul.f32.gmra.mxu0 %v137
    %v169 = vpop.f32.mrf.mxu0
    %v170 = vadd.f32 0.0, %v169
    %171 = vdwg.mxu0
    %v172 = vld [vmem:[%s4] sm:$0xff]
    %v173 = vld [vmem:[%s4 + $0x8] sm:$0xff]
    %v174 = vld [vmem:[%s4 + $0x10] sm:$0xff]
    %v175 = vld [vmem:[%s4 + $0x18] sm:$0xff]
    %v176 = vld [vmem:[%s4 + $0x20] sm:$0xff]
    %v177 = vld [vmem:[%s4 + $0x28] sm:$0xff]
    %v178 = vld [vmem:[%s4 + $0x30] sm:$0xff]
    %v179 = vld [vmem:[%s4 + $0x38] sm:$0xff]
    %v180 = vld [vmem:[%s4 + $0x40] sm:$0xff]
    %v181 = vld [vmem:[%s4 + $0x48] sm:$0xff]
    %v182 = vld [vmem:[%s4 + $0x50] sm:$0xff]
    %v183 = vld [vmem:[%s4 + $0x58] sm:$0xff]
    %v184 = vld [vmem:[%s4 + $0x60] sm:$0xff]
    %v185 = vld [vmem:[%s4 + $0x68] sm:$0xff]
    %v186 = vld [vmem:[%s4 + $0x70] sm:$0xff]
    %v187 = vld [vmem:[%s4 + $0x78] sm:$0xff]
    %v188 = vld [vmem:[%s4 + $0x80] sm:$0xff]
    %v189 = vld [vmem:[%s4 + $0x88] sm:$0xff]
    %vm190 = vcmask 39936
    %v192 = vsel %vm190, %v172, 0
    %v195 = vsel %vm190, %v173, 0
    %v198 = vsel %vm190, %v174, 0
    %v201 = vsel %vm190, %v175, 0
    %v204 = vsel %vm190, %v176, 0
    %v207 = vsel %vm190, %v177, 0
    %v210 = vsel %vm190, %v178, 0
    %v213 = vsel %vm190, %v179, 0
    %v216 = vsel %vm190, %v180, 0
    %v219 = vsel %vm190, %v181, 0
    %v222 = vsel %vm190, %v182, 0
    %v225 = vsel %vm190, %v183, 0
    %v228 = vsel %vm190, %v184, 0
    %v231 = vsel %vm190, %v185, 0
    %v234 = vsel %vm190, %v186, 0
    %v237 = vsel %vm190, %v187, 0
    %v240 = vsel %vm190, %v188, 0
    %v243 = vsel %vm190, %v189, 0
    %vm245 = vcmask 1044480
    %v247 = vsel %vm245, %v71, 0
    %249 = vmatpush.msra.mxu0 0.0
    %250 = vmatpush.msra.mxu0 0.0
    %251 = vmatpush.msra.mxu0 0.0
    %252 = vmatpush.msra.mxu0 0.0
    %253 = vmatpush.msra.mxu0 0.0
    %254 = vmatpush.msra.mxu0 0.0
    %255 = vmatpush.msra.mxu0 0.0
    %256 = vmatpush.msra.mxu0 0.0
    %257 = vmatpush.msra.mxu0 0.0
    %258 = vmatpush.msra.mxu0 0.0
    %259 = vmatpush.msra.mxu0 0.0
    %260 = vmatpush.msra.mxu0 0.0
    %261 = vmatpush.msra.mxu0 0.0
    %262 = vmatpush.msra.mxu0 0.0
    %263 = vmatpush.msra.mxu0 0.0
    %264 = vmatpush.msra.mxu0 %v247
    %265 = vmatmul.f32.gmra.mxu0 %v192
    %v266 = vpop.f32.mrf.mxu0
    %v267 = vadd.f32 0.0, %v266
    %268 = vmatmul.f32.gmra.mxu0 %v195
    %v269 = vpop.f32.mrf.mxu0
    %v270 = vadd.f32 0.0, %v269
    %271 = vmatmul.f32.gmra.mxu0 %v198
    %v272 = vpop.f32.mrf.mxu0
    %v273 = vadd.f32 0.0, %v272
    %274 = vmatmul.f32.gmra.mxu0 %v201
    %v275 = vpop.f32.mrf.mxu0
    %v276 = vadd.f32 0.0, %v275
    %277 = vmatmul.f32.gmra.mxu0 %v204
    %v278 = vpop.f32.mrf.mxu0
    %v279 = vadd.f32 0.0, %v278
    %280 = vmatmul.f32.gmra.mxu0 %v207
    %v281 = vpop.f32.mrf.mxu0
    %v282 = vadd.f32 0.0, %v281
    %283 = vmatmul.f32.gmra.mxu0 %v210
    %v284 = vpop.f32.mrf.mxu0
    %v285 = vadd.f32 0.0, %v284
    %286 = vmatmul.f32.gmra.mxu0 %v213
    %v287 = vpop.f32.mrf.mxu0
    %v288 = vadd.f32 0.0, %v287
    %289 = vmatmul.f32.gmra.mxu0 %v216
    %v290 = vpop.f32.mrf.mxu0
    %v291 = vadd.f32 0.0, %v290
    %292 = vmatmul.f32.gmra.mxu0 %v219
    %v293 = vpop.f32.mrf.mxu0
    %v294 = vadd.f32 0.0, %v293
    %295 = vmatmul.f32.gmra.mxu0 %v222
    %v296 = vpop.f32.mrf.mxu0
    %v297 = vadd.f32 0.0, %v296
    %298 = vmatmul.f32.gmra.mxu0 %v225
    %v299 = vpop.f32.mrf.mxu0
    %v300 = vadd.f32 0.0, %v299
    %301 = vmatmul.f32.gmra.mxu0 %v228
    %v302 = vpop.f32.mrf.mxu0
    %v303 = vadd.f32 0.0, %v302
    %304 = vmatmul.f32.gmra.mxu0 %v231
    %v305 = vpop.f32.mrf.mxu0
    %v306 = vadd.f32 0.0, %v305
    %307 = vmatmul.f32.gmra.mxu0 %v234
    %v308 = vpop.f32.mrf.mxu0
    %v309 = vadd.f32 0.0, %v308
    %310 = vmatmul.f32.gmra.mxu0 %v237
    %v311 = vpop.f32.mrf.mxu0
    %v312 = vadd.f32 0.0, %v311
    %313 = vmatmul.f32.gmra.mxu0 %v240
    %v314 = vpop.f32.mrf.mxu0
    %v315 = vadd.f32 0.0, %v314
    %316 = vmatmul.f32.gmra.mxu0 %v243
    %v317 = vpop.f32.mrf.mxu0
    %v318 = vadd.f32 0.0, %v317
    %319 = vdwg.mxu0
    %v320 = vmax.f32 %v267, 0.0
    %v321 = vmax.f32 %v270, 0.0
    %v322 = vmax.f32 %v273, 0.0
    %v323 = vmax.f32 %v276, 0.0
    %v324 = vmax.f32 %v279, 0.0
    %v325 = vmax.f32 %v282, 0.0
    %v326 = vmax.f32 %v285, 0.0
    %v327 = vmax.f32 %v288, 0.0
    %v328 = vmax.f32 %v291, 0.0
    %v329 = vmax.f32 %v294, 0.0
    %v330 = vmax.f32 %v297, 0.0
    %v331 = vmax.f32 %v300, 0.0
    %v332 = vmax.f32 %v303, 0.0
    %v333 = vmax.f32 %v306, 0.0
    %v334 = vmax.f32 %v309, 0.0
    %v335 = vmax.f32 %v312, 0.0
    %v336 = vmax.f32 %v315, 0.0
    %v337 = vmax.f32 %v318, 0.0
    %v338 = vld [vmem:[%s5] sm:$0xff]
    %v339 = vld [vmem:[%s5 + $0x8] sm:$0xff]
    %v340 = vld [vmem:[%s5 + $0x10] sm:$0xff]
    %v341 = vld [vmem:[%s5 + $0x18] sm:$0xff]
    %v342 = vld [vmem:[%s5 + $0x20] sm:$0xff]
    %v343 = vld [vmem:[%s5 + $0x28] sm:$0xff]
    %v344 = vld [vmem:[%s5 + $0x30] sm:$0xff]
    %v345 = vld [vmem:[%s5 + $0x38] sm:$0xff]
    %v346 = vld [vmem:[%s5 + $0x40] sm:$0xff]
    %v347 = vld [vmem:[%s5 + $0x48] sm:$0xff]
    %v348 = vld [vmem:[%s5 + $0x50] sm:$0xff]
    %v349 = vld [vmem:[%s5 + $0x58] sm:$0xff]
    %v350 = vld [vmem:[%s5 + $0x60] sm:$0xff]
    %v351 = vld [vmem:[%s5 + $0x68] sm:$0xff]
    %v352 = vld [vmem:[%s5 + $0x70] sm:$0xff]
    %v353 = vld [vmem:[%s5 + $0x78] sm:$0xff]
    %v354 = vld [vmem:[%s6] sm:$0xff]
    %v355 = vld [vmem:[%s6 + $0x8] sm:$0xff]
    %v356 = vld [vmem:[%s6 + $0x10] sm:$0xff]
    %v357 = vld [vmem:[%s6 + $0x18] sm:$0xff]
    %v358 = vld [vmem:[%s6 + $0x20] sm:$0xff]
    %v359 = vld [vmem:[%s6 + $0x28] sm:$0xff]
    %v360 = vld [vmem:[%s6 + $0x30] sm:$0xff]
    %v361 = vld [vmem:[%s6 + $0x38] sm:$0xff]
    %v362 = vld [vmem:[%s6 + $0x40] sm:$0xff]
    %v363 = vld [vmem:[%s6 + $0x48] sm:$0xff]
    %v364 = vld [vmem:[%s6 + $0x50] sm:$0xff]
    %v365 = vld [vmem:[%s6 + $0x58] sm:$0xff]
    %v366 = vld [vmem:[%s6 + $0x60] sm:$0xff]
    %v367 = vld [vmem:[%s6 + $0x68] sm:$0xff]
    %v368 = vld [vmem:[%s6 + $0x70] sm:$0xff]
    %v369 = vld [vmem:[%s6 + $0x78] sm:$0xff]
    %vm370 = vcmask 130048
    %v372 = vsel %vm370, %v354, 0
    %v375 = vsel %vm370, %v355, 0
    %v378 = vsel %vm370, %v356, 0
    %v381 = vsel %vm370, %v357, 0
    %v384 = vsel %vm370, %v358, 0
    %v387 = vsel %vm370, %v359, 0
    %v390 = vsel %vm370, %v360, 0
    %v393 = vsel %vm370, %v361, 0
    %v396 = vsel %vm370, %v362, 0
    %v399 = vsel %vm370, %v363, 0
    %v402 = vsel %vm370, %v364, 0
    %v405 = vsel %vm370, %v365, 0
    %v408 = vsel %vm370, %v366, 0
    %v411 = vsel %vm370, %v367, 0
    %v414 = vsel %vm370, %v368, 0
    %v417 = vsel %vm370, %v369, 0
    %419 = vmatpush.msra.mxu0 0.0
    %420 = vmatpush.msra.mxu0 0.0
    %421 = vmatpush.msra.mxu0 0.0
    %422 = vmatpush.msra.mxu0 0.0
    %423 = vmatpush.msra.mxu0 0.0
    %424 = vmatpush.msra.mxu0 0.0
    %425 = vmatpush.msra.mxu0 0.0
    %426 = vmatpush.msra.mxu0 0.0
    %427 = vmatpush.msra.mxu0 0.0
    %428 = vmatpush.msra.mxu0 0.0
    %429 = vmatpush.msra.mxu0 0.0
    %430 = vmatpush.msra.mxu0 0.0
    %431 = vmatpush.msra.mxu0 0.0
    %432 = vmatpush.msra.mxu0 0.0
    %433 = vmatpush.msra.mxu0 %v321
    %434 = vmatpush.msra.mxu0 %v320
    %435 = vmatmul.f32.gmra.mxu0 %v372
    %v436 = vpop.f32.mrf.mxu0
    %v437 = vadd.f32 0.0, %v436
    %438 = vmatmul.f32.gmra.mxu0 %v375
    %v439 = vpop.f32.mrf.mxu0
    %v440 = vadd.f32 0.0, %v439
    %441 = vmatmul.f32.gmra.mxu0 %v378
    %v442 = vpop.f32.mrf.mxu0
    %v443 = vadd.f32 0.0, %v442
    %444 = vmatmul.f32.gmra.mxu0 %v381
    %v445 = vpop.f32.mrf.mxu0
    %v446 = vadd.f32 0.0, %v445
    %447 = vmatmul.f32.gmra.mxu0 %v384
    %v448 = vpop.f32.mrf.mxu0
    %v449 = vadd.f32 0.0, %v448
    %450 = vmatmul.f32.gmra.mxu0 %v387
    %v451 = vpop.f32.mrf.mxu0
    %v452 = vadd.f32 0.0, %v451
    %453 = vmatmul.f32.gmra.mxu0 %v390
    %v454 = vpop.f32.mrf.mxu0
    %v455 = vadd.f32 0.0, %v454
    %456 = vmatmul.f32.gmra.mxu0 %v393
    %v457 = vpop.f32.mrf.mxu0
    %v458 = vadd.f32 0.0, %v457
    %459 = vmatmul.f32.gmra.mxu0 %v396
    %v460 = vpop.f32.mrf.mxu0
    %v461 = vadd.f32 0.0, %v460
    %462 = vmatmul.f32.gmra.mxu0 %v399
    %v463 = vpop.f32.mrf.mxu0
    %v464 = vadd.f32 0.0, %v463
    %465 = vmatmul.f32.gmra.mxu0 %v402
    %v466 = vpop.f32.mrf.mxu0
    %v467 = vadd.f32 0.0, %v466
    %468 = vmatmul.f32.gmra.mxu0 %v405
    %v469 = vpop.f32.mrf.mxu0
    %v470 = vadd.f32 0.0, %v469
    %471 = vmatmul.f32.gmra.mxu0 %v408
    %v472 = vpop.f32.mrf.mxu0
    %v473 = vadd.f32 0.0, %v472
    %474 = vmatmul.f32.gmra.mxu0 %v411
    %v475 = vpop.f32.mrf.mxu0
    %v476 = vadd.f32 0.0, %v475
    %477 = vmatmul.f32.gmra.mxu0 %v414
    %v478 = vpop.f32.mrf.mxu0
    %v479 = vadd.f32 0.0, %v478
    %480 = vmatmul.f32.gmra.mxu0 %v417
    %v481 = vpop.f32.mrf.mxu0
    %v482 = vadd.f32 0.0, %v481
    %483 = vdwg.mxu0
    %vm484 = vcmask 261120
    %v486 = vsel %vm484, %v338, 0
    %v489 = vsel %vm484, %v339, 0
    %v492 = vsel %vm484, %v340, 0
    %v495 = vsel %vm484, %v341, 0
    %v498 = vsel %vm484, %v342, 0
    %v501 = vsel %vm484, %v343, 0
    %v504 = vsel %vm484, %v344, 0
    %v507 = vsel %vm484, %v345, 0
    %v510 = vsel %vm484, %v346, 0
    %v513 = vsel %vm484, %v347, 0
    %v516 = vsel %vm484, %v348, 0
    %v519 = vsel %vm484, %v349, 0
    %v522 = vsel %vm484, %v350, 0
    %v525 = vsel %vm484, %v351, 0
    %v528 = vsel %vm484, %v352, 0
    %v531 = vsel %vm484, %v353, 0
    %533 = vmatpush.msra.mxu0 0.0
    %534 = vmatpush.msra.mxu0 0.0
    %535 = vmatpush.msra.mxu0 0.0
    %536 = vmatpush.msra.mxu0 0.0
    %537 = vmatpush.msra.mxu0 0.0
    %538 = vmatpush.msra.mxu0 0.0
    %539 = vmatpush.msra.mxu0 0.0
    %540 = vmatpush.msra.mxu0 0.0
    %541 = vmatpush.msra.mxu0 0.0
    %542 = vmatpush.msra.mxu0 0.0
    %543 = vmatpush.msra.mxu0 0.0
    %544 = vmatpush.msra.mxu0 0.0
    %545 = vmatpush.msra.mxu0 %v170
    %546 = vmatpush.msra.mxu0 %v167
    %547 = vmatpush.msra.mxu0 %v164
    %548 = vmatpush.msra.mxu0 %v161
    %549 = vmatmul.f32.gmra.mxu0 %v486
    %v550 = vpop.f32.mrf.mxu0
    %v551 = vadd.f32 %v437, %v550
    %552 = vmatmul.f32.gmra.mxu0 %v489
    %v553 = vpop.f32.mrf.mxu0
    %v554 = vadd.f32 %v440, %v553
    %555 = vmatmul.f32.gmra.mxu0 %v492
    %v556 = vpop.f32.mrf.mxu0
    %v557 = vadd.f32 %v443, %v556
    %558 = vmatmul.f32.gmra.mxu0 %v495
    %v559 = vpop.f32.mrf.mxu0
    %v560 = vadd.f32 %v446, %v559
    %561 = vmatmul.f32.gmra.mxu0 %v498
    %v562 = vpop.f32.mrf.mxu0
    %v563 = vadd.f32 %v449, %v562
    %564 = vmatmul.f32.gmra.mxu0 %v501
    %v565 = vpop.f32.mrf.mxu0
    %v566 = vadd.f32 %v452, %v565
    %567 = vmatmul.f32.gmra.mxu0 %v504
    %v568 = vpop.f32.mrf.mxu0
    %v569 = vadd.f32 %v455, %v568
    %570 = vmatmul.f32.gmra.mxu0 %v507
    %v571 = vpop.f32.mrf.mxu0
    %v572 = vadd.f32 %v458, %v571
    %573 = vmatmul.f32.gmra.mxu0 %v510
    %v574 = vpop.f32.mrf.mxu0
    %v575 = vadd.f32 %v461, %v574
    %576 = vmatmul.f32.gmra.mxu0 %v513
    %v577 = vpop.f32.mrf.mxu0
    %v578 = vadd.f32 %v464, %v577
    %579 = vmatmul.f32.gmra.mxu0 %v516
    %v580 = vpop.f32.mrf.mxu0
    %v581 = vadd.f32 %v467, %v580
    %582 = vmatmul.f32.gmra.mxu0 %v519
    %v583 = vpop.f32.mrf.mxu0
    %v584 = vadd.f32 %v470, %v583
    %585 = vmatmul.f32.gmra.mxu0 %v522
    %v586 = vpop.f32.mrf.mxu0
    %v587 = vadd.f32 %v473, %v586
    %588 = vmatmul.f32.gmra.mxu0 %v525
    %v589 = vpop.f32.mrf.mxu0
    %v590 = vadd.f32 %v476, %v589
    %591 = vmatmul.f32.gmra.mxu0 %v528
    %v592 = vpop.f32.mrf.mxu0
    %v593 = vadd.f32 %v479, %v592
    %594 = vmatmul.f32.gmra.mxu0 %v531
    %v595 = vpop.f32.mrf.mxu0
    %v596 = vadd.f32 %v482, %v595
    %597 = vdwg.mxu0
    %v598 = vld [vmem:[%s7] sm:$0xff]
    %v599 = vld [vmem:[%s7 + $0x8] sm:$0xff]
    %v600 = vld [vmem:[%s7 + $0x10] sm:$0xff]
    %v601 = vld [vmem:[%s7 + $0x18] sm:$0xff]
    %v602 = vld [vmem:[%s7 + $0x20] sm:$0xff]
    %v603 = vld [vmem:[%s7 + $0x28] sm:$0xff]
    %v604 = vld [vmem:[%s7 + $0x30] sm:$0xff]
    %v605 = vld [vmem:[%s7 + $0x38] sm:$0xff]
    %v606 = vld [vmem:[%s7 + $0x40] sm:$0xff]
    %v607 = vld [vmem:[%s7 + $0x48] sm:$0xff]
    %v608 = vld [vmem:[%s7 + $0x50] sm:$0xff]
    %v609 = vld [vmem:[%s7 + $0x58] sm:$0xff]
    %v610 = vld [vmem:[%s7 + $0x60] sm:$0xff]
    %v611 = vld [vmem:[%s7 + $0x68] sm:$0xff]
    %v612 = vld [vmem:[%s7 + $0x70] sm:$0xff]
    %v613 = vld [vmem:[%s7 + $0x78] sm:$0xff]
    %615 = vset.pattern.permute.xlu0 0
    %616 = vperm.xlu0 %615, %v598
    %v617 = vpop.permute.xlu0 %616
    %620 = vset.pattern.permute.xlu0 0
    %621 = vperm.xlu0 %620, %v599
    %v622 = vpop.permute.xlu0 %621
    %625 = vset.pattern.permute.xlu0 0
    %626 = vperm.xlu0 %625, %v600
    %v627 = vpop.permute.xlu0 %626
    %630 = vset.pattern.permute.xlu0 0
    %631 = vperm.xlu0 %630, %v601
    %v632 = vpop.permute.xlu0 %631
    %635 = vset.pattern.permute.xlu0 0
    %636 = vperm.xlu0 %635, %v602
    %v637 = vpop.permute.xlu0 %636
    %640 = vset.pattern.permute.xlu0 0
    %641 = vperm.xlu0 %640, %v603
    %v642 = vpop.permute.xlu0 %641
    %645 = vset.pattern.permute.xlu0 0
    %646 = vperm.xlu0 %645, %v604
    %v647 = vpop.permute.xlu0 %646
    %650 = vset.pattern.permute.xlu0 0
    %651 = vperm.xlu0 %650, %v605
    %v652 = vpop.permute.xlu0 %651
    %655 = vset.pattern.permute.xlu0 0
    %656 = vperm.xlu0 %655, %v606
    %v657 = vpop.permute.xlu0 %656
    %660 = vset.pattern.permute.xlu0 0
    %661 = vperm.xlu0 %660, %v607
    %v662 = vpop.permute.xlu0 %661
    %665 = vset.pattern.permute.xlu0 0
    %666 = vperm.xlu0 %665, %v608
    %v667 = vpop.permute.xlu0 %666
    %670 = vset.pattern.permute.xlu0 0
    %671 = vperm.xlu0 %670, %v609
    %v672 = vpop.permute.xlu0 %671
    %675 = vset.pattern.permute.xlu0 0
    %676 = vperm.xlu0 %675, %v610
    %v677 = vpop.permute.xlu0 %676
    %680 = vset.pattern.permute.xlu0 0
    %681 = vperm.xlu0 %680, %v611
    %v682 = vpop.permute.xlu0 %681
    %685 = vset.pattern.permute.xlu0 0
    %686 = vperm.xlu0 %685, %v612
    %v687 = vpop.permute.xlu0 %686
    %690 = vset.pattern.permute.xlu0 0
    %691 = vperm.xlu0 %690, %v613
    %v692 = vpop.permute.xlu0 %691
    %v694 = vadd.f32 %v551, %v617
    %v695 = vadd.f32 %v554, %v622
    %v696 = vadd.f32 %v557, %v627
    %v697 = vadd.f32 %v560, %v632
    %v698 = vadd.f32 %v563, %v637
    %v699 = vadd.f32 %v566, %v642
    %v700 = vadd.f32 %v569, %v647
    %v701 = vadd.f32 %v572, %v652
    %v702 = vadd.f32 %v575, %v657
    %v703 = vadd.f32 %v578, %v662
    %v704 = vadd.f32 %v581, %v667
    %v705 = vadd.f32 %v584, %v672
    %v706 = vadd.f32 %v587, %v677
    %v707 = vadd.f32 %v590, %v682
    %v708 = vadd.f32 %v593, %v687
    %v709 = vadd.f32 %v596, %v692
    %v710 = vmax.f32 %v694, 0.0
    %v711 = vmax.f32 %v695, 0.0
    %v712 = vmax.f32 %v696, 0.0
    %v713 = vmax.f32 %v697, 0.0
    %v714 = vmax.f32 %v698, 0.0
    %v715 = vmax.f32 %v699, 0.0
    %v716 = vmax.f32 %v700, 0.0
    %v717 = vmax.f32 %v701, 0.0
    %v718 = vmax.f32 %v702, 0.0
    %v719 = vmax.f32 %v703, 0.0
    %v720 = vmax.f32 %v704, 0.0
    %v721 = vmax.f32 %v705, 0.0
    %v722 = vmax.f32 %v706, 0.0
    %v723 = vmax.f32 %v707, 0.0
    %v724 = vmax.f32 %v708, 0.0
    %v725 = vmax.f32 %v709, 0.0
    %v726 = vld [vmem:[%s8] sm:$0xff]
    %v727 = vld [vmem:[%s8 + $0x8] sm:$0xff]
    %v728 = vld [vmem:[%s8 + $0x10] sm:$0xff]
    %v729 = vld [vmem:[%s8 + $0x18] sm:$0xff]
    %v730 = vld [vmem:[%s8 + $0x20] sm:$0xff]
    %v731 = vld [vmem:[%s8 + $0x28] sm:$0xff]
    %v732 = vld [vmem:[%s8 + $0x30] sm:$0xff]
    %v733 = vld [vmem:[%s8 + $0x38] sm:$0xff]
    %v734 = vld [vmem:[%s9] sm:$0xff]
    %v735 = vld [vmem:[%s9 + $0x8] sm:$0xff]
    %v736 = vld [vmem:[%s9 + $0x10] sm:$0xff]
    %v737 = vld [vmem:[%s9 + $0x18] sm:$0xff]
    %v738 = vld [vmem:[%s9 + $0x20] sm:$0xff]
    %v739 = vld [vmem:[%s9 + $0x28] sm:$0xff]
    %v740 = vld [vmem:[%s9 + $0x30] sm:$0xff]
    %v741 = vld [vmem:[%s9 + $0x38] sm:$0xff]
    %743 = vset.pattern.permute.xlu0 0
    %744 = vperm.xlu0 %743, %v734
    %v745 = vpop.permute.xlu0 %744
    %748 = vset.pattern.permute.xlu0 0
    %749 = vperm.xlu0 %748, %v735
    %v750 = vpop.permute.xlu0 %749
    %753 = vset.pattern.permute.xlu0 0
    %754 = vperm.xlu0 %753, %v736
    %v755 = vpop.permute.xlu0 %754
    %758 = vset.pattern.permute.xlu0 0
    %759 = vperm.xlu0 %758, %v737
    %v760 = vpop.permute.xlu0 %759
    %763 = vset.pattern.permute.xlu0 0
    %764 = vperm.xlu0 %763, %v738
    %v765 = vpop.permute.xlu0 %764
    %768 = vset.pattern.permute.xlu0 0
    %769 = vperm.xlu0 %768, %v739
    %v770 = vpop.permute.xlu0 %769
    %773 = vset.pattern.permute.xlu0 0
    %774 = vperm.xlu0 %773, %v740
    %v775 = vpop.permute.xlu0 %774
    %778 = vset.pattern.permute.xlu0 0
    %779 = vperm.xlu0 %778, %v741
    %v780 = vpop.permute.xlu0 %779
    %782 = vmatpush.msra.mxu0 %v725
    %783 = vmatpush.msra.mxu0 %v724
    %784 = vmatpush.msra.mxu0 %v723
    %785 = vmatpush.msra.mxu0 %v722
    %786 = vmatpush.msra.mxu0 %v721
    %787 = vmatpush.msra.mxu0 %v720
    %788 = vmatpush.msra.mxu0 %v719
    %789 = vmatpush.msra.mxu0 %v718
    %790 = vmatpush.msra.mxu0 %v717
    %791 = vmatpush.msra.mxu0 %v716
    %792 = vmatpush.msra.mxu0 %v715
    %793 = vmatpush.msra.mxu0 %v714
    %794 = vmatpush.msra.mxu0 %v713
    %795 = vmatpush.msra.mxu0 %v712
    %796 = vmatpush.msra.mxu0 %v711
    %797 = vmatpush.msra.mxu0 %v710
    %798 = vmatmul.f32.gmra.mxu0 %v726
    %v799 = vpop.f32.mrf.mxu0
    %v800 = vadd.f32 %v745, %v799
    %801 = vmatmul.f32.gmra.mxu0 %v727
    %v802 = vpop.f32.mrf.mxu0
    %v803 = vadd.f32 %v750, %v802
    %804 = vmatmul.f32.gmra.mxu0 %v728
    %v805 = vpop.f32.mrf.mxu0
    %v806 = vadd.f32 %v755, %v805
    %807 = vmatmul.f32.gmra.mxu0 %v729
    %v808 = vpop.f32.mrf.mxu0
    %v809 = vadd.f32 %v760, %v808
    %810 = vmatmul.f32.gmra.mxu0 %v730
    %v811 = vpop.f32.mrf.mxu0
    %v812 = vadd.f32 %v765, %v811
    %813 = vmatmul.f32.gmra.mxu0 %v731
    %v814 = vpop.f32.mrf.mxu0
    %v815 = vadd.f32 %v770, %v814
    %816 = vmatmul.f32.gmra.mxu0 %v732
    %v817 = vpop.f32.mrf.mxu0
    %v818 = vadd.f32 %v775, %v817
    %819 = vmatmul.f32.gmra.mxu0 %v733
    %v820 = vpop.f32.mrf.mxu0
    %v821 = vadd.f32 %v780, %v820
    %822 = vdwg.mxu0
    %v823 = vmax.f32 %v800, 0.0
    %v824 = vmax.f32 %v803, 0.0
    %v825 = vmax.f32 %v806, 0.0
    %v826 = vmax.f32 %v809, 0.0
    %v827 = vmax.f32 %v812, 0.0
    %v828 = vmax.f32 %v815, 0.0
    %v829 = vmax.f32 %v818, 0.0
    %v830 = vmax.f32 %v821, 0.0
    %v831 = vld [vmem:[%s10] sm:$0x1]
    %v832 = vld [vmem:[#allocation2] sm:$0x1]
    %834 = vset.pattern.permute.xlu0 0
    %835 = vperm.xlu0 %834, %v832
    %v836 = vpop.permute.xlu0 %835
    %v838 = vperm.slane %v836, 0
    %vm839 = vcmask 523264
    %v841 = vsel %vm839, %v831, 0
    %843 = vmatpush.msra.mxu0 0.0
    %844 = vmatpush.msra.mxu0 0.0
    %845 = vmatpush.msra.mxu0 0.0
    %846 = vmatpush.msra.mxu0 0.0
    %847 = vmatpush.msra.mxu0 0.0
    %848 = vmatpush.msra.mxu0 0.0
    %849 = vmatpush.msra.mxu0 0.0
    %850 = vmatpush.msra.mxu0 0.0
    %851 = vmatpush.msra.mxu0 %v830
    %852 = vmatpush.msra.mxu0 %v829
    %853 = vmatpush.msra.mxu0 %v828
    %854 = vmatpush.msra.mxu0 %v827
    %855 = vmatpush.msra.mxu0 %v826
    %856 = vmatpush.msra.mxu0 %v825
    %857 = vmatpush.msra.mxu0 %v824
    %858 = vmatpush.msra.mxu0 %v823
    %859 = vmatmul.f32.gmra.mxu0 %v841
    %v860 = vpop.f32.mrf.mxu0
    %v861 = vadd.f32 %v838, %v860
    %862 = vdwg.mxu0
    %v863 = vld [vmem:[%s12] sm:$0xff]
    %v864 = vld [vmem:[%s12 + $0x8] sm:$0xff]
    %v865 = vld [vmem:[%s12 + $0x10] sm:$0xff]
    %v866 = vld [vmem:[%s12 + $0x18] sm:$0xff]
    %v867 = vld [vmem:[%s12 + $0x20] sm:$0xff]
    %v868 = vld [vmem:[%s12 + $0x28] sm:$0xff]
    %v869 = vld [vmem:[%s12 + $0x30] sm:$0xff]
    %v870 = vld [vmem:[%s12 + $0x38] sm:$0xff]
    %v871 = vld [vmem:[%s12 + $0x40] sm:$0xff]
    %v872 = vld [vmem:[%s12 + $0x48] sm:$0xff]
    %v873 = vld [vmem:[%s12 + $0x50] sm:$0xff]
    %v874 = vld [vmem:[%s12 + $0x58] sm:$0xff]
    %v875 = vld [vmem:[%s12 + $0x60] sm:$0xff]
    %v876 = vld [vmem:[%s12 + $0x68] sm:$0xff]
    %v877 = vld [vmem:[%s12 + $0x70] sm:$0xff]
    %v878 = vld [vmem:[%s12 + $0x78] sm:$0xff]
    %v879 = vld [vmem:[%s12 + $0x80] sm:$0xff]
    %v880 = vld [vmem:[%s12 + $0x88] sm:$0xff]
    %v881 = vld [vmem:[%s12 + $0x90] sm:$0xff]
    %v882 = vld [vmem:[%s12 + $0x98] sm:$0xff]
    %v883 = vld [vmem:[%s12 + $0xa0] sm:$0xff]
    %v884 = vld [vmem:[%s12 + $0xa8] sm:$0xff]
    %v885 = vld [vmem:[%s12 + $0xb0] sm:$0xff]
    %v886 = vld [vmem:[%s12 + $0xb8] sm:$0xff]
    %v887 = vld [vmem:[%s12 + $0xc0] sm:$0xff]
    %v888 = vld [vmem:[%s12 + $0xc8] sm:$0xff]
    %v889 = vld [vmem:[%s12 + $0xd0] sm:$0xff]
    %v890 = vld [vmem:[%s12 + $0xd8] sm:$0xff]
    %v891 = vld [vmem:[%s12 + $0xe0] sm:$0xff]
    %v892 = vld [vmem:[%s12 + $0xe8] sm:$0xff]
    %v893 = vld [vmem:[%s12 + $0xf0] sm:$0xff]
    %v894 = vld [vmem:[%s12 + $0xf8] sm:$0xff]
    %v895 = vld [vmem:[%s13] sm:$0xff]
    %v896 = vld [vmem:[%s13 + $0x8] sm:$0xff]
    %v897 = vld [vmem:[%s13 + $0x10] sm:$0xff]
    %v898 = vld [vmem:[%s13 + $0x18] sm:$0xff]
    %v899 = vld [vmem:[%s13 + $0x20] sm:$0xff]
    %v900 = vld [vmem:[%s13 + $0x28] sm:$0xff]
    %v901 = vld [vmem:[%s13 + $0x30] sm:$0xff]
    %v902 = vld [vmem:[%s13 + $0x38] sm:$0xff]
    %v903 = vld [vmem:[%s13 + $0x40] sm:$0xff]
    %v904 = vld [vmem:[%s13 + $0x48] sm:$0xff]
    %v905 = vld [vmem:[%s13 + $0x50] sm:$0xff]
    %v906 = vld [vmem:[%s13 + $0x58] sm:$0xff]
    %v907 = vld [vmem:[%s13 + $0x60] sm:$0xff]
    %v908 = vld [vmem:[%s13 + $0x68] sm:$0xff]
    %v909 = vld [vmem:[%s13 + $0x70] sm:$0xff]
    %v910 = vld [vmem:[%s13 + $0x78] sm:$0xff]
    %v911 = vld [vmem:[%s13 + $0x80] sm:$0xff]
    %v912 = vld [vmem:[%s13 + $0x88] sm:$0xff]
    %v913 = vld [vmem:[%s13 + $0x90] sm:$0xff]
    %v914 = vld [vmem:[%s13 + $0x98] sm:$0xff]
    %v915 = vld [vmem:[%s13 + $0xa0] sm:$0xff]
    %v916 = vld [vmem:[%s13 + $0xa8] sm:$0xff]
    %v917 = vld [vmem:[%s13 + $0xb0] sm:$0xff]
    %v918 = vld [vmem:[%s13 + $0xb8] sm:$0xff]
    %v919 = vld [vmem:[%s13 + $0xc0] sm:$0xff]
    %v920 = vld [vmem:[%s13 + $0xc8] sm:$0xff]
    %v921 = vld [vmem:[%s13 + $0xd0] sm:$0xff]
    %v922 = vld [vmem:[%s13 + $0xd8] sm:$0xff]
    %v923 = vld [vmem:[%s13 + $0xe0] sm:$0xff]
    %v924 = vld [vmem:[%s13 + $0xe8] sm:$0xff]
    %v925 = vld [vmem:[%s13 + $0xf0] sm:$0xff]
    %v926 = vld [vmem:[%s13 + $0xf8] sm:$0xff]
    %928 = vset.pattern.permute.xlu0 0
    %929 = vperm.xlu0 %928, %v895
    %v930 = vpop.permute.xlu0 %929
    %933 = vset.pattern.permute.xlu0 0
    %934 = vperm.xlu0 %933, %v896
    %v935 = vpop.permute.xlu0 %934
    %938 = vset.pattern.permute.xlu0 0
    %939 = vperm.xlu0 %938, %v897
    %v940 = vpop.permute.xlu0 %939
    %943 = vset.pattern.permute.xlu0 0
    %944 = vperm.xlu0 %943, %v898
    %v945 = vpop.permute.xlu0 %944
    %948 = vset.pattern.permute.xlu0 0
    %949 = vperm.xlu0 %948, %v899
    %v950 = vpop.permute.xlu0 %949
    %953 = vset.pattern.permute.xlu0 0
    %954 = vperm.xlu0 %953, %v900
    %v955 = vpop.permute.xlu0 %954
    %958 = vset.pattern.permute.xlu0 0
    %959 = vperm.xlu0 %958, %v901
    %v960 = vpop.permute.xlu0 %959
    %963 = vset.pattern.permute.xlu0 0
    %964 = vperm.xlu0 %963, %v902
    %v965 = vpop.permute.xlu0 %964
    %968 = vset.pattern.permute.xlu0 0
    %969 = vperm.xlu0 %968, %v903
    %v970 = vpop.permute.xlu0 %969
    %973 = vset.pattern.permute.xlu0 0
    %974 = vperm.xlu0 %973, %v904
    %v975 = vpop.permute.xlu0 %974
    %978 = vset.pattern.permute.xlu0 0
    %979 = vperm.xlu0 %978, %v905
    %v980 = vpop.permute.xlu0 %979
    %983 = vset.pattern.permute.xlu0 0
    %984 = vperm.xlu0 %983, %v906
    %v985 = vpop.permute.xlu0 %984
    %988 = vset.pattern.permute.xlu0 0
    %989 = vperm.xlu0 %988, %v907
    %v990 = vpop.permute.xlu0 %989
    %993 = vset.pattern.permute.xlu0 0
    %994 = vperm.xlu0 %993, %v908
    %v995 = vpop.permute.xlu0 %994
    %998 = vset.pattern.permute.xlu0 0
    %999 = vperm.xlu0 %998, %v909
    %v1000 = vpop.permute.xlu0 %999
    %1003 = vset.pattern.permute.xlu0 0
    %1004 = vperm.xlu0 %1003, %v910
    %v1005 = vpop.permute.xlu0 %1004
    %1008 = vset.pattern.permute.xlu0 0
    %1009 = vperm.xlu0 %1008, %v911
    %v1010 = vpop.permute.xlu0 %1009
    %1013 = vset.pattern.permute.xlu0 0
    %1014 = vperm.xlu0 %1013, %v912
    %v1015 = vpop.permute.xlu0 %1014
    %1018 = vset.pattern.permute.xlu0 0
    %1019 = vperm.xlu0 %1018, %v913
    %v1020 = vpop.permute.xlu0 %1019
    %1023 = vset.pattern.permute.xlu0 0
    %1024 = vperm.xlu0 %1023, %v914
    %v1025 = vpop.permute.xlu0 %1024
    %1028 = vset.pattern.permute.xlu0 0
    %1029 = vperm.xlu0 %1028, %v915
    %v1030 = vpop.permute.xlu0 %1029
    %1033 = vset.pattern.permute.xlu0 0
    %1034 = vperm.xlu0 %1033, %v916
    %v1035 = vpop.permute.xlu0 %1034
    %1038 = vset.pattern.permute.xlu0 0
    %1039 = vperm.xlu0 %1038, %v917
    %v1040 = vpop.permute.xlu0 %1039
    %1043 = vset.pattern.permute.xlu0 0
    %1044 = vperm.xlu0 %1043, %v918
    %v1045 = vpop.permute.xlu0 %1044
    %1048 = vset.pattern.permute.xlu0 0
    %1049 = vperm.xlu0 %1048, %v919
    %v1050 = vpop.permute.xlu0 %1049
    %1053 = vset.pattern.permute.xlu0 0
    %1054 = vperm.xlu0 %1053, %v920
    %v1055 = vpop.permute.xlu0 %1054
    %1058 = vset.pattern.permute.xlu0 0
    %1059 = vperm.xlu0 %1058, %v921
    %v1060 = vpop.permute.xlu0 %1059
    %1063 = vset.pattern.permute.xlu0 0
    %1064 = vperm.xlu0 %1063, %v922
    %v1065 = vpop.permute.xlu0 %1064
    %1068 = vset.pattern.permute.xlu0 0
    %1069 = vperm.xlu0 %1068, %v923
    %v1070 = vpop.permute.xlu0 %1069
    %1073 = vset.pattern.permute.xlu0 0
    %1074 = vperm.xlu0 %1073, %v924
    %v1075 = vpop.permute.xlu0 %1074
    %1078 = vset.pattern.permute.xlu0 0
    %1079 = vperm.xlu0 %1078, %v925
    %v1080 = vpop.permute.xlu0 %1079
    %1083 = vset.pattern.permute.xlu0 0
    %1084 = vperm.xlu0 %1083, %v926
    %v1085 = vpop.permute.xlu0 %1084
    %1087 = vmatpush.msra.mxu0 %v337
    %1088 = vmatpush.msra.mxu0 %v336
    %1089 = vmatpush.msra.mxu0 %v335
    %1090 = vmatpush.msra.mxu0 %v334
    %1091 = vmatpush.msra.mxu0 %v333
    %1092 = vmatpush.msra.mxu0 %v332
    %1093 = vmatpush.msra.mxu0 %v331
    %1094 = vmatpush.msra.mxu0 %v330
    %1095 = vmatpush.msra.mxu0 %v329
    %1096 = vmatpush.msra.mxu0 %v328
    %1097 = vmatpush.msra.mxu0 %v327
    %1098 = vmatpush.msra.mxu0 %v326
    %1099 = vmatpush.msra.mxu0 %v325
    %1100 = vmatpush.msra.mxu0 %v324
    %1101 = vmatpush.msra.mxu0 %v323
    %1102 = vmatpush.msra.mxu0 %v322
    %1103 = vmatmul.f32.gmra.mxu0 %v863
    %v1104 = vpop.f32.mrf.mxu0
    %v1105 = vadd.f32 %v930, %v1104
    %1106 = vmatmul.f32.gmra.mxu0 %v864
    %v1107 = vpop.f32.mrf.mxu0
    %v1108 = vadd.f32 %v935, %v1107
    %1109 = vmatmul.f32.gmra.mxu0 %v865
    %v1110 = vpop.f32.mrf.mxu0
    %v1111 = vadd.f32 %v940, %v1110
    %1112 = vmatmul.f32.gmra.mxu0 %v866
    %v1113 = vpop.f32.mrf.mxu0
    %v1114 = vadd.f32 %v945, %v1113
    %1115 = vmatmul.f32.gmra.mxu0 %v867
    %v1116 = vpop.f32.mrf.mxu0
    %v1117 = vadd.f32 %v950, %v1116
    %1118 = vmatmul.f32.gmra.mxu0 %v868
    %v1119 = vpop.f32.mrf.mxu0
    %v1120 = vadd.f32 %v955, %v1119
    %1121 = vmatmul.f32.gmra.mxu0 %v869
    %v1122 = vpop.f32.mrf.mxu0
    %v1123 = vadd.f32 %v960, %v1122
    %1124 = vmatmul.f32.gmra.mxu0 %v870
    %v1125 = vpop.f32.mrf.mxu0
    %v1126 = vadd.f32 %v965, %v1125
    %1127 = vmatmul.f32.gmra.mxu0 %v871
    %v1128 = vpop.f32.mrf.mxu0
    %v1129 = vadd.f32 %v970, %v1128
    %1130 = vmatmul.f32.gmra.mxu0 %v872
    %v1131 = vpop.f32.mrf.mxu0
    %v1132 = vadd.f32 %v975, %v1131
    %1133 = vmatmul.f32.gmra.mxu0 %v873
    %v1134 = vpop.f32.mrf.mxu0
    %v1135 = vadd.f32 %v980, %v1134
    %1136 = vmatmul.f32.gmra.mxu0 %v874
    %v1137 = vpop.f32.mrf.mxu0
    %v1138 = vadd.f32 %v985, %v1137
    %1139 = vmatmul.f32.gmra.mxu0 %v875
    %v1140 = vpop.f32.mrf.mxu0
    %v1141 = vadd.f32 %v990, %v1140
    %1142 = vmatmul.f32.gmra.mxu0 %v876
    %v1143 = vpop.f32.mrf.mxu0
    %v1144 = vadd.f32 %v995, %v1143
    %1145 = vmatmul.f32.gmra.mxu0 %v877
    %v1146 = vpop.f32.mrf.mxu0
    %v1147 = vadd.f32 %v1000, %v1146
    %1148 = vmatmul.f32.gmra.mxu0 %v878
    %v1149 = vpop.f32.mrf.mxu0
    %v1150 = vadd.f32 %v1005, %v1149
    %1151 = vmatmul.f32.gmra.mxu0 %v879
    %v1152 = vpop.f32.mrf.mxu0
    %v1153 = vadd.f32 %v1010, %v1152
    %1154 = vmatmul.f32.gmra.mxu0 %v880
    %v1155 = vpop.f32.mrf.mxu0
    %v1156 = vadd.f32 %v1015, %v1155
    %1157 = vmatmul.f32.gmra.mxu0 %v881
    %v1158 = vpop.f32.mrf.mxu0
    %v1159 = vadd.f32 %v1020, %v1158
    %1160 = vmatmul.f32.gmra.mxu0 %v882
    %v1161 = vpop.f32.mrf.mxu0
    %v1162 = vadd.f32 %v1025, %v1161
    %1163 = vmatmul.f32.gmra.mxu0 %v883
    %v1164 = vpop.f32.mrf.mxu0
    %v1165 = vadd.f32 %v1030, %v1164
    %1166 = vmatmul.f32.gmra.mxu0 %v884
    %v1167 = vpop.f32.mrf.mxu0
    %v1168 = vadd.f32 %v1035, %v1167
    %1169 = vmatmul.f32.gmra.mxu0 %v885
    %v1170 = vpop.f32.mrf.mxu0
    %v1171 = vadd.f32 %v1040, %v1170
    %1172 = vmatmul.f32.gmra.mxu0 %v886
    %v1173 = vpop.f32.mrf.mxu0
    %v1174 = vadd.f32 %v1045, %v1173
    %1175 = vmatmul.f32.gmra.mxu0 %v887
    %v1176 = vpop.f32.mrf.mxu0
    %v1177 = vadd.f32 %v1050, %v1176
    %1178 = vmatmul.f32.gmra.mxu0 %v888
    %v1179 = vpop.f32.mrf.mxu0
    %v1180 = vadd.f32 %v1055, %v1179
    %1181 = vmatmul.f32.gmra.mxu0 %v889
    %v1182 = vpop.f32.mrf.mxu0
    %v1183 = vadd.f32 %v1060, %v1182
    %1184 = vmatmul.f32.gmra.mxu0 %v890
    %v1185 = vpop.f32.mrf.mxu0
    %v1186 = vadd.f32 %v1065, %v1185
    %1187 = vmatmul.f32.gmra.mxu0 %v891
    %v1188 = vpop.f32.mrf.mxu0
    %v1189 = vadd.f32 %v1070, %v1188
    %1190 = vmatmul.f32.gmra.mxu0 %v892
    %v1191 = vpop.f32.mrf.mxu0
    %v1192 = vadd.f32 %v1075, %v1191
    %1193 = vmatmul.f32.gmra.mxu0 %v893
    %v1194 = vpop.f32.mrf.mxu0
    %v1195 = vadd.f32 %v1080, %v1194
    %1196 = vmatmul.f32.gmra.mxu0 %v894
    %v1197 = vpop.f32.mrf.mxu0
    %v1198 = vadd.f32 %v1085, %v1197
    %1199 = vdwg.mxu0
    %v1200 = vmax.f32 %v1105, 0.0
    %v1201 = vmax.f32 %v1108, 0.0
    %v1202 = vmax.f32 %v1111, 0.0
    %v1203 = vmax.f32 %v1114, 0.0
    %v1204 = vmax.f32 %v1117, 0.0
    %v1205 = vmax.f32 %v1120, 0.0
    %v1206 = vmax.f32 %v1123, 0.0
    %v1207 = vmax.f32 %v1126, 0.0
    %v1208 = vmax.f32 %v1129, 0.0
    %v1209 = vmax.f32 %v1132, 0.0
    %v1210 = vmax.f32 %v1135, 0.0
    %v1211 = vmax.f32 %v1138, 0.0
    %v1212 = vmax.f32 %v1141, 0.0
    %v1213 = vmax.f32 %v1144, 0.0
    %v1214 = vmax.f32 %v1147, 0.0
    %v1215 = vmax.f32 %v1150, 0.0
    %v1216 = vmax.f32 %v1153, 0.0
    %v1217 = vmax.f32 %v1156, 0.0
    %v1218 = vmax.f32 %v1159, 0.0
    %v1219 = vmax.f32 %v1162, 0.0
    %v1220 = vmax.f32 %v1165, 0.0
    %v1221 = vmax.f32 %v1168, 0.0
    %v1222 = vmax.f32 %v1171, 0.0
    %v1223 = vmax.f32 %v1174, 0.0
    %v1224 = vmax.f32 %v1177, 0.0
    %v1225 = vmax.f32 %v1180, 0.0
    %v1226 = vmax.f32 %v1183, 0.0
    %v1227 = vmax.f32 %v1186, 0.0
    %v1228 = vmax.f32 %v1189, 0.0
    %v1229 = vmax.f32 %v1192, 0.0
    %v1230 = vmax.f32 %v1195, 0.0
    %v1231 = vmax.f32 %v1198, 0.0
    %v1232 = vld [vmem:[%s14] sm:$0xff]
    %v1233 = vld [vmem:[%s14 + $0x8] sm:$0xff]
    %v1234 = vld [vmem:[%s14 + $0x10] sm:$0xff]
    %v1235 = vld [vmem:[%s14 + $0x18] sm:$0xff]
    %v1236 = vld [vmem:[%s14 + $0x20] sm:$0xff]
    %v1237 = vld [vmem:[%s14 + $0x28] sm:$0xff]
    %v1238 = vld [vmem:[%s14 + $0x30] sm:$0xff]
    %v1239 = vld [vmem:[%s14 + $0x38] sm:$0xff]
    %v1240 = vld [vmem:[%s14 + $0x40] sm:$0xff]
    %v1241 = vld [vmem:[%s14 + $0x48] sm:$0xff]
    %v1242 = vld [vmem:[%s14 + $0x50] sm:$0xff]
    %v1243 = vld [vmem:[%s14 + $0x58] sm:$0xff]
    %v1244 = vld [vmem:[%s14 + $0x60] sm:$0xff]
    %v1245 = vld [vmem:[%s14 + $0x68] sm:$0xff]
    %v1246 = vld [vmem:[%s14 + $0x70] sm:$0xff]
    %v1247 = vld [vmem:[%s14 + $0x78] sm:$0xff]
    %v1248 = vld [vmem:[%s15] sm:$0xff]
    %v1249 = vld [vmem:[%s15 + $0x8] sm:$0xff]
    %v1250 = vld [vmem:[%s15 + $0x10] sm:$0xff]
    %v1251 = vld [vmem:[%s15 + $0x18] sm:$0xff]
    %v1252 = vld [vmem:[%s15 + $0x20] sm:$0xff]
    %v1253 = vld [vmem:[%s15 + $0x28] sm:$0xff]
    %v1254 = vld [vmem:[%s15 + $0x30] sm:$0xff]
    %v1255 = vld [vmem:[%s15 + $0x38] sm:$0xff]
    %1257 = vset.pattern.permute.xlu0 0
    %1258 = vperm.xlu0 %1257, %v1248
    %v1259 = vpop.permute.xlu0 %1258
    %1262 = vset.pattern.permute.xlu0 0
    %1263 = vperm.xlu0 %1262, %v1249
    %v1264 = vpop.permute.xlu0 %1263
    %1267 = vset.pattern.permute.xlu0 0
    %1268 = vperm.xlu0 %1267, %v1250
    %v1269 = vpop.permute.xlu0 %1268
    %1272 = vset.pattern.permute.xlu0 0
    %1273 = vperm.xlu0 %1272, %v1251
    %v1274 = vpop.permute.xlu0 %1273
    %1277 = vset.pattern.permute.xlu0 0
    %1278 = vperm.xlu0 %1277, %v1252
    %v1279 = vpop.permute.xlu0 %1278
    %1282 = vset.pattern.permute.xlu0 0
    %1283 = vperm.xlu0 %1282, %v1253
    %v1284 = vpop.permute.xlu0 %1283
    %1287 = vset.pattern.permute.xlu0 0
    %1288 = vperm.xlu0 %1287, %v1254
    %v1289 = vpop.permute.xlu0 %1288
    %1292 = vset.pattern.permute.xlu0 0
    %1293 = vperm.xlu0 %1292, %v1255
    %v1294 = vpop.permute.xlu0 %1293
    %1296 = vmatpush.msra.mxu0 %v1215
    %1297 = vmatpush.msra.mxu0 %v1214
    %1298 = vmatpush.msra.mxu0 %v1213
    %1299 = vmatpush.msra.mxu0 %v1212
    %1300 = vmatpush.msra.mxu0 %v1211
    %1301 = vmatpush.msra.mxu0 %v1210
    %1302 = vmatpush.msra.mxu0 %v1209
    %1303 = vmatpush.msra.mxu0 %v1208
    %1304 = vmatpush.msra.mxu0 %v1207
    %1305 = vmatpush.msra.mxu0 %v1206
    %1306 = vmatpush.msra.mxu0 %v1205
    %1307 = vmatpush.msra.mxu0 %v1204
    %1308 = vmatpush.msra.mxu0 %v1203
    %1309 = vmatpush.msra.mxu0 %v1202
    %1310 = vmatpush.msra.mxu0 %v1201
    %1311 = vmatpush.msra.mxu0 %v1200
    %1312 = vmatmul.f32.gmra.mxu0 %v1232
    %v1313 = vpop.f32.mrf.mxu0
    %v1314 = vadd.f32 %v1259, %v1313
    %1315 = vmatmul.f32.gmra.mxu0 %v1234
    %v1316 = vpop.f32.mrf.mxu0
    %v1317 = vadd.f32 %v1264, %v1316
    %1318 = vmatmul.f32.gmra.mxu0 %v1236
    %v1319 = vpop.f32.mrf.mxu0
    %v1320 = vadd.f32 %v1269, %v1319
    %1321 = vmatmul.f32.gmra.mxu0 %v1238
    %v1322 = vpop.f32.mrf.mxu0
    %v1323 = vadd.f32 %v1274, %v1322
    %1324 = vmatmul.f32.gmra.mxu0 %v1240
    %v1325 = vpop.f32.mrf.mxu0
    %v1326 = vadd.f32 %v1279, %v1325
    %1327 = vmatmul.f32.gmra.mxu0 %v1242
    %v1328 = vpop.f32.mrf.mxu0
    %v1329 = vadd.f32 %v1284, %v1328
    %1330 = vmatmul.f32.gmra.mxu0 %v1244
    %v1331 = vpop.f32.mrf.mxu0
    %v1332 = vadd.f32 %v1289, %v1331
    %1333 = vmatmul.f32.gmra.mxu0 %v1246
    %v1334 = vpop.f32.mrf.mxu0
    %v1335 = vadd.f32 %v1294, %v1334
    %1336 = vdwg.mxu0
    %1337 = vmatpush.msra.mxu0 %v1231
    %1338 = vmatpush.msra.mxu0 %v1230
    %1339 = vmatpush.msra.mxu0 %v1229
    %1340 = vmatpush.msra.mxu0 %v1228
    %1341 = vmatpush.msra.mxu0 %v1227
    %1342 = vmatpush.msra.mxu0 %v1226
    %1343 = vmatpush.msra.mxu0 %v1225
    %1344 = vmatpush.msra.mxu0 %v1224
    %1345 = vmatpush.msra.mxu0 %v1223
    %1346 = vmatpush.msra.mxu0 %v1222
    %1347 = vmatpush.msra.mxu0 %v1221
    %1348 = vmatpush.msra.mxu0 %v1220
    %1349 = vmatpush.msra.mxu0 %v1219
    %1350 = vmatpush.msra.mxu0 %v1218
    %1351 = vmatpush.msra.mxu0 %v1217
    %1352 = vmatpush.msra.mxu0 %v1216
    %1353 = vmatmul.f32.gmra.mxu0 %v1233
    %v1354 = vpop.f32.mrf.mxu0
    %v1355 = vadd.f32 %v1314, %v1354
    %1356 = vmatmul.f32.gmra.mxu0 %v1235
    %v1357 = vpop.f32.mrf.mxu0
    %v1358 = vadd.f32 %v1317, %v1357
    %1359 = vmatmul.f32.gmra.mxu0 %v1237
    %v1360 = vpop.f32.mrf.mxu0
    %v1361 = vadd.f32 %v1320, %v1360
    %1362 = vmatmul.f32.gmra.mxu0 %v1239
    %v1363 = vpop.f32.mrf.mxu0
    %v1364 = vadd.f32 %v1323, %v1363
    %1365 = vmatmul.f32.gmra.mxu0 %v1241
    %v1366 = vpop.f32.mrf.mxu0
    %v1367 = vadd.f32 %v1326, %v1366
    %1368 = vmatmul.f32.gmra.mxu0 %v1243
    %v1369 = vpop.f32.mrf.mxu0
    %v1370 = vadd.f32 %v1329, %v1369
    %1371 = vmatmul.f32.gmra.mxu0 %v1245
    %v1372 = vpop.f32.mrf.mxu0
    %v1373 = vadd.f32 %v1332, %v1372
    %1374 = vmatmul.f32.gmra.mxu0 %v1247
    %v1375 = vpop.f32.mrf.mxu0
    %v1376 = vadd.f32 %v1335, %v1375
    %1377 = vdwg.mxu0
    %v1378 = vmax.f32 %v1355, 0.0
    %v1379 = vmax.f32 %v1358, 0.0
    %v1380 = vmax.f32 %v1361, 0.0
    %v1381 = vmax.f32 %v1364, 0.0
    %v1382 = vmax.f32 %v1367, 0.0
    %v1383 = vmax.f32 %v1370, 0.0
    %v1384 = vmax.f32 %v1373, 0.0
    %v1385 = vmax.f32 %v1376, 0.0
    %v1386 = vld [vmem:[%s16] sm:$0xff]
    %v1387 = vld [vmem:[%s16 + $0x8] sm:$0xff]
    %v1388 = vld [vmem:[%s17] sm:$0xff]
    %v1389 = vld [vmem:[%s17 + $0x8] sm:$0xff]
    %1391 = vset.pattern.permute.xlu0 0
    %1392 = vperm.xlu0 %1391, %v1388
    %v1393 = vpop.permute.xlu0 %1392
    %1396 = vset.pattern.permute.xlu0 0
    %1397 = vperm.xlu0 %1396, %v1389
    %v1398 = vpop.permute.xlu0 %1397
    %v1401 = vsel %vm839, %v1386, 0
    %v1404 = vsel %vm839, %v1387, 0
    %1406 = vmatpush.msra.mxu0 0.0
    %1407 = vmatpush.msra.mxu0 0.0
    %1408 = vmatpush.msra.mxu0 0.0
    %1409 = vmatpush.msra.mxu0 0.0
    %1410 = vmatpush.msra.mxu0 0.0
    %1411 = vmatpush.msra.mxu0 0.0
    %1412 = vmatpush.msra.mxu0 0.0
    %1413 = vmatpush.msra.mxu0 0.0
    %1414 = vmatpush.msra.mxu0 %v1385
    %1415 = vmatpush.msra.mxu0 %v1384
    %1416 = vmatpush.msra.mxu0 %v1383
    %1417 = vmatpush.msra.mxu0 %v1382
    %1418 = vmatpush.msra.mxu0 %v1381
    %1419 = vmatpush.msra.mxu0 %v1380
    %1420 = vmatpush.msra.mxu0 %v1379
    %1421 = vmatpush.msra.mxu0 %v1378
    %1422 = vmatmul.f32.gmra.mxu0 %v1401
    %v1423 = vpop.f32.mrf.mxu0
    %v1424 = vadd.f32 %v1393, %v1423
    %1425 = vmatmul.f32.gmra.mxu0 %v1404
    %v1426 = vpop.f32.mrf.mxu0
    %v1427 = vadd.f32 %v1398, %v1426
    %1428 = vdwg.mxu0
    %v1429 = vmax.f32 %v1424, 0.0
    %v1430 = vmax.f32 %v1427, 0.0
    %v1431 = vld [vmem:[%s18] sm:$0x1]
    %v1432 = vld [vmem:[#allocation3] sm:$0x1]
    %1434 = vset.pattern.permute.xlu0 0
    %1435 = vperm.xlu0 %1434, %v1432
    %v1436 = vpop.permute.xlu0 %1435
    %v1438 = vperm.slane %v1436, 0
    %v1440 = vsel %vm370, %v1431, 0
    %1442 = vmatpush.msra.mxu0 0.0
    %1443 = vmatpush.msra.mxu0 0.0
    %1444 = vmatpush.msra.mxu0 0.0
    %1445 = vmatpush.msra.mxu0 0.0
    %1446 = vmatpush.msra.mxu0 0.0
    %1447 = vmatpush.msra.mxu0 0.0
    %1448 = vmatpush.msra.mxu0 0.0
    %1449 = vmatpush.msra.mxu0 0.0
    %1450 = vmatpush.msra.mxu0 0.0
    %1451 = vmatpush.msra.mxu0 0.0
    %1452 = vmatpush.msra.mxu0 0.0
    %1453 = vmatpush.msra.mxu0 0.0
    %1454 = vmatpush.msra.mxu0 0.0
    %1455 = vmatpush.msra.mxu0 0.0
    %1456 = vmatpush.msra.mxu0 %v1430
    %1457 = vmatpush.msra.mxu0 %v1429
    %1458 = vmatmul.f32.gmra.mxu0 %v1440
    %v1459 = vpop.f32.mrf.mxu0
    %v1460 = vadd.f32 %v1438, %v1459
    %1461 = vdwg.mxu0
    %v1462 = vmul.f32 %v1460, %v861
    %vm1463 = vcmask 253952
    %1464 = vst.msk [vmem:[#allocation4] sm:$0x1] %vm1463, %v1462
    // Predicated region
    $region82: #{tpu_custom_call.1} parent=1 // pred_check
      _
    $region83: #{tpu_custom_call.1} parent=1 // pred_check_branch
      %1466 = sbr.rel (0) target = $region85
    $region84: #{tpu_custom_call.1} parent=1 // pred_region
      %1468 = vsyncadd [#allocation5], 0
      %s1470 = sshll.u32 [#allocation4], 4
      %s1471 = int_to_ptr.vmem [resolvable:$true] %s1470
      %s1472 = sshll.u32 %s20, 4
      %s1473 = int_to_ptr.hbm [resolvable:$true] %s1472
      %1475 = dma.vmem_to_hbm [thread:$0]  %s1471, 16, %s1473, [#allocation5]
    $region85: #{tpu_custom_call.1} parent=1 // pred_fallthru
      _
    // Predicated region
    $region86: #{tpu_custom_call.1} parent=1 // pred_check
      _
    $region87: #{tpu_custom_call.1} parent=1 // pred_check_branch
      %1477 = sbr.rel (0) target = $region89
    $region88: #{tpu_custom_call.1} parent=1 // pred_region
      %1479 = dma.done [#allocation5], 16
    $region89: #{tpu_custom_call.1} parent=1 // pred_fallthru
      _
    %1480 = vsyncpa [#allocation5], 1

</llo_original>
